<compile_context>
chip_gen: v7x
topology: tpu7x:2x2x1
jax: 0.10.0
libtpu: 0.0.40
codegen_flags: <defaults>
</compile_context>

<pallas_src>
import jax
import jax.numpy as jnp
from jax.experimental import pallas as pl
from jax.experimental.pallas import tpu as pltpu


def _convlstm_kernel(w_ref, b_ref, pat_ref, cprev_ref, h_ref, c_ref):
    """One pixel-block per grid step.

    w_ref    : (4*Ch, Kp)  bf16  conv weights (gates on sublanes, K on lanes)
    b_ref    : (4*Ch, 1)   f32   conv bias
    pat_ref  : (Kp, Np)    bf16  im2col patches (pixels on lanes)
    cprev_ref: (Ch, Np)    f32   previous cell state
    h_ref    : (Ch, Np)    f32   new hidden state (output)
    c_ref    : (Ch, Np)    f32   new cell state (output)
    """
    ch = cprev_ref.shape[0]

    # Entire 3x3 conv == a single MXU matmul with f32 accumulation.
    acc = jnp.dot(w_ref[...], pat_ref[...],
                  preferred_element_type=jnp.float32)      # (4*Ch, Np)
    acc = acc + b_ref[...]                                 # bias: lane-broadcast of (4*Ch, 1)

    # Gate split matches torch.split(conv_res, hidden_size, dim=1).
    # Sublane slices at multiples of Ch (Ch % 8 == 0) -> no lane relayout.
    netin = acc[0 * ch:1 * ch, :]
    igate = acc[1 * ch:2 * ch, :]
    fgate = acc[2 * ch:3 * ch, :]
    ogate = acc[3 * ch:4 * ch, :]

    c_prev = cprev_ref[...]
    c_new = jax.nn.sigmoid(fgate) * c_prev + jax.nn.sigmoid(igate) * jnp.tanh(netin)
    h_new = jax.nn.sigmoid(ogate) * jnp.tanh(c_new)

    h_ref[...] = h_new.astype(h_ref.dtype)
    c_ref[...] = c_new.astype(c_ref.dtype)


@jax.jit
def convlstm_cell_forward(x, h_prev, c_prev, weight, bias):
    """ConvLSTMCell.forward.

    x      : (B, Cin_x, H, W)   NCHW, like the PyTorch module
    h_prev : (B, Ch, H, W)
    c_prev : (B, Ch, H, W)
    weight : (4*Ch, Cin_x+Ch, 3, 3)  PyTorch Conv2d layout (OIHW)
    bias   : (4*Ch,)
    returns (h_curr, c_curr) each (B, Ch, H, W)
    """
    B, Cx, H, W = x.shape
    Ch = h_prev.shape[1]
    Cout = 4 * Ch
    Cin = Cx + Ch
    K = Cin * 9
    N = B * H * W
    assert Ch % 8 == 0, "hidden_size must be a multiple of 8 for this kernel"

    # --- glue: im2col of cat(x, h_prev), K ordering = (cin, ky, kx) ---------
    xh = jnp.concatenate([x, h_prev], axis=1)                     # (B, Cin, H, W) f32
    xh_t = jnp.transpose(xh, (1, 0, 2, 3)).astype(jnp.bfloat16)   # (Cin, B, H, W)
    xp = jnp.pad(xh_t, ((0, 0), (0, 0), (1, 1), (1, 1)))          # (Cin, B, H+2, W+2)
    taps = [xp[:, :, ky:ky + H, kx:kx + W]
            for ky in range(3) for kx in range(3)]                # 9 x (Cin, B, H, W)
    pat = jnp.stack(taps, axis=1).reshape(K, N)                   # K idx = cin*9 + ky*3 + kx

    # Pad K to a lane-dense multiple of 128 (zero rows/cols contribute nothing).
    Kp = ((K + 127) // 128) * 128
    pat = jnp.pad(pat, ((0, Kp - K), (0, 0)))                     # (Kp, N)  bf16

    # Weight OIHW -> (4*Ch, Cin*9), same K ordering as the patches.
    w2d = weight.reshape(Cout, K).astype(jnp.bfloat16)
    w2d = jnp.pad(w2d, ((0, 0), (0, Kp - K)))                     # (4*Ch, Kp) bf16
    b2 = bias.reshape(Cout, 1).astype(jnp.float32)                # (4*Ch, 1)

    # Previous cell state: channels on sublanes, pixels on lanes.
    cprev_flat = jnp.transpose(c_prev, (1, 0, 2, 3)).reshape(Ch, N)

    # 2-way split of the pixel axis keeps both v7x TensorCores busy while each
    # block stays large and 128-lane aligned (single extra cheap step on v5e/v6e).
    n_blocks = 2 if (N % 256 == 0) else 1
    Np = N // n_blocks

    h_flat, c_flat = pl.pallas_call(
        _convlstm_kernel,
        out_shape=(
            jax.ShapeDtypeStruct((Ch, N), jnp.float32),
            jax.ShapeDtypeStruct((Ch, N), jnp.float32),
        ),
        grid_spec=pltpu.PrefetchScalarGridSpec(
            num_scalar_prefetch=0,
            grid=(n_blocks,),
            in_specs=[
                pl.BlockSpec((Cout, Kp), lambda n: (0, 0)),   # weights (resident)
                pl.BlockSpec((Cout, 1), lambda n: (0, 0)),    # bias    (resident)
                pl.BlockSpec((Kp, Np), lambda n: (0, n)),     # im2col patches
                pl.BlockSpec((Ch, Np), lambda n: (0, n)),     # c_prev
            ],
            out_specs=[
                pl.BlockSpec((Ch, Np), lambda n: (0, n)),
                pl.BlockSpec((Ch, Np), lambda n: (0, n)),
            ],
        ),
        compiler_params=pltpu.CompilerParams(
            dimension_semantics=("parallel",),
        ),
    )(w2d, b2, pat, cprev_flat)

    # back to NCHW to match the PyTorch module
    h_curr = jnp.transpose(h_flat.reshape(Ch, B, H, W), (1, 0, 2, 3))
    c_curr = jnp.transpose(c_flat.reshape(Ch, B, H, W), (1, 0, 2, 3))
    return h_curr, c_curr


def _reference_forward_f32(x, h_prev, c_prev, weight, bias):
    """Pure-JAX reference matching the PyTorch semantics exactly (f32 NCHW conv)."""
    xh = jnp.concatenate([x, h_prev], axis=1)
    conv_res = jax.lax.conv_general_dilated(
        xh, weight, window_strides=(1, 1), padding=((1, 1), (1, 1)),
        dimension_numbers=("NCHW", "OIHW", "NCHW"),
    ) + bias[None, :, None, None]
    netin, igate, fgate, ogate = jnp.split(conv_res, 4, axis=1)
    c_curr = jax.nn.sigmoid(fgate) * c_prev + jax.nn.sigmoid(igate) * jnp.tanh(netin)
    h_curr = jax.nn.sigmoid(ogate) * jnp.tanh(c_curr)
    return h_curr, c_curr


def _reference_forward_mixed(x, h_prev, c_prev, weight, bias):
    """Same math but with bf16 conv operands + f32 accumulation, mirroring the
    kernel's MXU precision (built independently of the kernel's im2col)."""
    xh = jnp.concatenate([x, h_prev], axis=1).astype(jnp.bfloat16)
    conv_res = jax.lax.conv_general_dilated(
        xh, weight.astype(jnp.bfloat16), window_strides=(1, 1),
        padding=((1, 1), (1, 1)),
        dimension_numbers=("NCHW", "OIHW", "NCHW"),
        preferred_element_type=jnp.float32,
    ) + bias[None, :, None, None]
    netin, igate, fgate, ogate = jnp.split(conv_res, 4, axis=1)
    c_curr = jax.nn.sigmoid(fgate) * c_prev + jax.nn.sigmoid(igate) * jnp.tanh(netin)
    h_curr = jax.nn.sigmoid(ogate) * jnp.tanh(c_curr)
    return h_curr, c_curr


if __name__ == "__main__":
    # Module hyperparameters (small, consistent with the PyTorch __init__).
    batch_size = 2
    input_size = 4
    hidden_size = 32
    height = 16
    width = 16

    key = jax.random.PRNGKey(0)
    kx, kw, kb, kh, kc = jax.random.split(key, 5)

    # Deterministic parameter init mirroring reset_parameters():
    # uniform(-std, std) with std = 1/sqrt(hidden_size).
    std = 1.0 / jnp.sqrt(jnp.float32(hidden_size))
    cin = input_size + hidden_size
    weight = jax.random.uniform(
        kw, (4 * hidden_size, cin, 3, 3), jnp.float32, -std, std
    )
    bias = jax.random.uniform(kb, (4 * hidden_size,), jnp.float32, -std, std)

    x = jax.random.normal(kx, (batch_size, input_size, height, width), jnp.float32)
    h_prev = jax.random.normal(kh, (batch_size, hidden_size, height, width), jnp.float32)
    c_prev = jax.random.normal(kc, (batch_size, hidden_size, height, width), jnp.float32)

    h_out, c_out = convlstm_cell_forward(x, h_prev, c_prev, weight, bias)
    jax.block_until_ready((h_out, c_out))

    assert h_out.shape == (batch_size, hidden_size, height, width)
    assert c_out.shape == (batch_size, hidden_size, height, width)

    # Tight check vs. a reference with the same MXU precision (bf16 in, f32 acc).
    h_mp, c_mp = _reference_forward_mixed(x, h_prev, c_prev, weight, bias)
    assert jnp.allclose(h_out, h_mp, atol=2e-3, rtol=2e-3)
    assert jnp.allclose(c_out, c_mp, atol=2e-3, rtol=2e-3)

    # Loose check vs. exact f32 module semantics (difference = bf16 MXU rounding only).
    h_ref, c_ref = _reference_forward_f32(x, h_prev, c_prev, weight, bias)
    assert jnp.allclose(h_out, h_ref, atol=5e-2, rtol=5e-2)
    assert jnp.allclose(c_out, c_ref, atol=5e-2, rtol=5e-2)

    print("KERNEL_OK")
</pallas_src>

<mosaic_0001>
module attributes {stable_mosaic.version = 11 : i64} {
  func.func @_convlstm_kernel(%arg0: i32, %arg1: memref<128x384xbf16, #tpu.memory_space<vmem>>, %arg2: memref<128x1xf32, #tpu.memory_space<vmem>>, %arg3: memref<384x256xbf16, #tpu.memory_space<vmem>>, %arg4: memref<32x256xf32, #tpu.memory_space<vmem>>, %arg5: memref<32x256xf32, #tpu.memory_space<vmem>>, %arg6: memref<32x256xf32, #tpu.memory_space<vmem>>) attributes {dimension_semantics = [#tpu.dimension_semantics<parallel>], iteration_bounds = array<i64: 2>, scalar_prefetch = 0 : i64, scratch_operands = 0 : i64, tpu.core_type = #tpu.core_type<tc>, window_params = [{pipeline_mode = #tpu.pipeline_mode<synchronous>, transform_indices = @transform_0, window_bounds = array<i64: 128, 384>}, {pipeline_mode = #tpu.pipeline_mode<synchronous>, transform_indices = @transform_1, window_bounds = array<i64: 128, 1>}, {transform_indices = @transform_2, window_bounds = array<i64: 384, 256>}, {transform_indices = @transform_3, window_bounds = array<i64: 32, 256>}, {transform_indices = @transform_4, window_bounds = array<i64: 32, 256>}, {transform_indices = @transform_5, window_bounds = array<i64: 32, 256>}]} {
    %c0 = arith.constant 0 : index
    %c0_0 = arith.constant 0 : index
    %0 = vector.load %arg1[%c0, %c0_0] : memref<128x384xbf16, #tpu.memory_space<vmem>>, vector<128x384xbf16>
    %c0_1 = arith.constant 0 : index
    %c0_2 = arith.constant 0 : index
    %1 = vector.load %arg3[%c0_1, %c0_2] : memref<384x256xbf16, #tpu.memory_space<vmem>>, vector<384x256xbf16>
    %cst = arith.constant dense<0.000000e+00> : vector<128x256xf32>
    %2 = tpu.matmul %0, %1, %cst {dimension_numbers = #tpu.dot_dimension_numbers<[1], [0], [0], [1], [0, 0, 1, 1], [], []>} : vector<128x384xbf16>, vector<384x256xbf16>, vector<128x256xf32> -> vector<128x256xf32>
    %c0_3 = arith.constant 0 : index
    %c0_4 = arith.constant 0 : index
    %3 = vector.load %arg2[%c0_3, %c0_4] : memref<128x1xf32, #tpu.memory_space<vmem>>, vector<128x1xf32>
    %4 = vector.broadcast %3 : vector<128x1xf32> to vector<128x256xf32>
    %5 = arith.addf %2, %4 : vector<128x256xf32>
    %6 = vector.extract_strided_slice %5 {offsets = [0, 0], sizes = [32, 256], strides = [1, 1]} : vector<128x256xf32> to vector<32x256xf32>
    %7 = vector.extract_strided_slice %5 {offsets = [32, 0], sizes = [32, 256], strides = [1, 1]} : vector<128x256xf32> to vector<32x256xf32>
    %8 = vector.extract_strided_slice %5 {offsets = [64, 0], sizes = [32, 256], strides = [1, 1]} : vector<128x256xf32> to vector<32x256xf32>
    %9 = vector.extract_strided_slice %5 {offsets = [96, 0], sizes = [32, 256], strides = [1, 1]} : vector<128x256xf32> to vector<32x256xf32>
    %c0_5 = arith.constant 0 : index
    %c0_6 = arith.constant 0 : index
    %10 = vector.load %arg4[%c0_5, %c0_6] : memref<32x256xf32, #tpu.memory_space<vmem>>, vector<32x256xf32>
    %11 = arith.negf %8 : vector<32x256xf32>
    %12 = math.exp %11 : vector<32x256xf32>
    %cst_7 = arith.constant 1.000000e+00 : f32
    %13 = vector.broadcast %cst_7 : f32 to vector<32x256xf32>
    %14 = arith.addf %13, %12 : vector<32x256xf32>
    %15 = arith.divf %13, %14 : vector<32x256xf32>
    %16 = arith.mulf %15, %10 : vector<32x256xf32>
    %17 = arith.negf %7 : vector<32x256xf32>
    %18 = math.exp %17 : vector<32x256xf32>
    %cst_8 = arith.constant 1.000000e+00 : f32
    %19 = vector.broadcast %cst_8 : f32 to vector<32x256xf32>
    %20 = arith.addf %19, %18 : vector<32x256xf32>
    %21 = arith.divf %19, %20 : vector<32x256xf32>
    %22 = math.tanh %6 : vector<32x256xf32>
    %23 = arith.mulf %21, %22 : vector<32x256xf32>
    %24 = arith.addf %16, %23 : vector<32x256xf32>
    %25 = arith.negf %9 : vector<32x256xf32>
    %26 = math.exp %25 : vector<32x256xf32>
    %cst_9 = arith.constant 1.000000e+00 : f32
    %27 = vector.broadcast %cst_9 : f32 to vector<32x256xf32>
    %28 = arith.addf %27, %26 : vector<32x256xf32>
    %29 = arith.divf %27, %28 : vector<32x256xf32>
    %30 = math.tanh %24 : vector<32x256xf32>
    %31 = arith.mulf %29, %30 : vector<32x256xf32>
    %c0_10 = arith.constant 0 : index
    %c0_11 = arith.constant 0 : index
    %32 = vector.load %arg5[%c0_10, %c0_11] : memref<32x256xf32, #tpu.memory_space<vmem>>, vector<32x256xf32>
    tpu.vector_store %arg5[%c0_10, %c0_11], %31 {strides = array<i32>} : memref<32x256xf32, #tpu.memory_space<vmem>>, vector<32x256xf32>,
    %c0_12 = arith.constant 0 : index
    %c0_13 = arith.constant 0 : index
    %33 = vector.load %arg6[%c0_12, %c0_13] : memref<32x256xf32, #tpu.memory_space<vmem>>, vector<32x256xf32>
    tpu.vector_store %arg6[%c0_12, %c0_13], %24 {strides = array<i32>} : memref<32x256xf32, #tpu.memory_space<vmem>>, vector<32x256xf32>,
    return
  }
  func.func @transform_0(%arg0: i32) -> (i32, i32) {
    %c0_i32 = arith.constant 0 : i32
    %c0_i32_0 = arith.constant 0 : i32
    %c0_i32_1 = arith.constant 0 : i32
    return %c0_i32, %c0_i32_0 : i32, i32
  }
  func.func @transform_1(%arg0: i32) -> (i32, i32) {
    %c0_i32 = arith.constant 0 : i32
    %c0_i32_0 = arith.constant 0 : i32
    %c0_i32_1 = arith.constant 0 : i32
    return %c0_i32, %c0_i32_0 : i32, i32
  }
  func.func @transform_2(%arg0: i32) -> (i32, i32) {
    %c0_i32 = arith.constant 0 : i32
    %c0_i32_0 = arith.constant 0 : i32
    return %c0_i32, %arg0 : i32, i32
  }
  func.func @transform_3(%arg0: i32) -> (i32, i32) {
    %c0_i32 = arith.constant 0 : i32
    %c0_i32_0 = arith.constant 0 : i32
    return %c0_i32, %arg0 : i32, i32
  }
  func.func @transform_4(%arg0: i32) -> (i32, i32) {
    %c0_i32 = arith.constant 0 : i32
    %c0_i32_0 = arith.constant 0 : i32
    return %c0_i32, %arg0 : i32, i32
  }
  func.func @transform_5(%arg0: i32) -> (i32, i32) {
    %c0_i32 = arith.constant 0 : i32
    %c0_i32_0 = arith.constant 0 : i32
    return %c0_i32, %arg0 : i32, i32
  }
}

</mosaic_0001>

<llo_original>
// kernel: convlstm_cell_forward.1
$region0: #{convlstm_cell_forward.1}
  #allocation0 [shape = 'u32[]', space=smem, size = 0x4, offset = 0x4, fixed_abs, tag = 'smem constant byte address 0x4 - core index']
  #allocation1 [shape = 'u32[144,128]{1,0:T(1,128)}', space=vmem, size = 0x12000, scoped, tag = 'internal scratch']
  %s0 = inlined_call_operand.vmem [shape: bf16[128,384], index: 0, kind: input, shape index: {}]
  %s1 = inlined_call_operand.vmem [shape: f32[128,1], index: 1, kind: input, shape index: {}]
  %s2 = inlined_call_operand.vmem [shape: bf16[384,512], index: 2, kind: input, shape index: {}]
  %s3 = inlined_call_operand.vmem [shape: f32[32,512], index: 3, kind: input, shape index: {}]
  %s4 = inlined_call_operand.vmem [shape: f32[32,512], index: 4, kind: output, shape index: {0}]
  %s5 = inlined_call_operand.vmem [shape: f32[32,512], index: 5, kind: output, shape index: {1}]
  %6 = xla_tuple %s4, %s5
  %s7 = sld [smem:[#allocation0]]
  $region156: #{convlstm_cell_forward.1} parent=0
    _
  %s9 = ssub.s32 1, %s7
  %s10 = scalar_select 0, %s9, %s7
  $region1: #{convlstm_cell_forward.1} parent=0
    #allocation2 [shape = 'u8[393216]{0}', space=vmem, size = 0x60000, scoped, tag = 'input window, operand 2']
    #allocation3 [shape = 'u8[65536]{0}', space=vmem, size = 0x10000, scoped, tag = 'input window, operand 3']
    #allocation4 [shape = 'u8[65536]{0}', space=vmem, size = 0x10000, scoped, tag = 'output window, operand 0']
    #allocation5 [shape = 'u8[65536]{0}', space=vmem, size = 0x10000, scoped, tag = 'output window, operand 1']
    loop: start=0, step=1, limit=4
    $region2: #{convlstm_cell_forward.1} parent=1 // loop_pre_header
      _
    $region3: #{convlstm_cell_forward.1} parent=1 // loop_header
      %s12 = sphi 0, %s16
      %p13 = scmp.ge.s32.totalorder %s12, 4
      %s20 = sphi 0, %s20
      %s22 = sphi 0, %s20
      %s23 = sphi 0, %s22
      %s37 = sphi 0, %s23
      %s41 = sphi 0, %s41
      %s43 = sphi 0, %s41
      %s44 = sphi 0, %s43
      %s58 = sphi 0, %s44
      %s64 = sphi 0, %s66
      %s67 = sphi 0, %s64
      %s68 = sphi 0, %s67
      %s84 = sphi 0, %s68
      %s90 = sphi 0, %s92
      %s93 = sphi 0, %s90
      %s94 = sphi 0, %s93
      %s110 = sphi 0, %s94
      %s116 = sphi 0, %s118
      %s119 = sphi 0, %s116
      %s120 = sphi 0, %s119
      %s136 = sphi 0, %s120
      %s142 = sphi 0, %s144
      %s145 = sphi 0, %s142
      %s146 = sphi 0, %s145
      %s162 = sphi 0, %s146
    $region4: #{convlstm_cell_forward.1} parent=1 // loop_header_branch
      %15 = sbr.rel (%p13) target = $region8
    $region5: #{convlstm_cell_forward.1} parent=1 // loop_body
      %s17 = ssub.s32 %s12, 1
      %s18 = ssub.s32 %s12, 2
      %s19 = sadd.s32 %s12, 1
      %s21 = sadd.s32 %s20, 1
      %p24 = scmp.eq.s32.totalorder %s12, 1
      %p25 = scmp.ne.s32.totalorder %s20, %s22
      %p26 = scmp.eq.s32.totalorder %s12, 0
      %p27 = por %p25, %p26
      %p28 = scmp.ne.s32.totalorder %s20, %s22
      %p29 = scmp.eq.s32.totalorder %s17, 1
      %p30 = por %p28, %p29
      %p31 = scmp.ne.s32.totalorder %s22, %s23
      %p32 = scmp.eq.s32.totalorder %s17, 0
      %p33 = por %p31, %p32
      %p34 = scmp.ne.s32.totalorder %s22, %s23
      %p35 = scmp.eq.s32.totalorder %s18, 1
      %p36 = por %p34, %p35
      %p38 = scmp.ne.s32.totalorder %s23, %s37
      %p39 = scmp.eq.s32.totalorder %s18, 0
      %p40 = por %p38, %p39
      %s42 = sadd.s32 %s41, 1
      %p45 = scmp.eq.s32.totalorder %s12, 1
      %p46 = scmp.ne.s32.totalorder %s41, %s43
      %p47 = scmp.eq.s32.totalorder %s12, 0
      %p48 = por %p46, %p47
      %p49 = scmp.ne.s32.totalorder %s41, %s43
      %p50 = scmp.eq.s32.totalorder %s17, 1
      %p51 = por %p49, %p50
      %p52 = scmp.ne.s32.totalorder %s43, %s44
      %p53 = scmp.eq.s32.totalorder %s17, 0
      %p54 = por %p52, %p53
      %p55 = scmp.ne.s32.totalorder %s43, %s44
      %p56 = scmp.eq.s32.totalorder %s18, 1
      %p57 = por %p55, %p56
      %p59 = scmp.ne.s32.totalorder %s44, %s58
      %p60 = scmp.eq.s32.totalorder %s18, 0
      %p61 = por %p59, %p60
      %s62 = ssub.s32 %s12, %s19
      %p63 = scmp.eq.s32.totalorder %s62, 0
      %s65 = sadd.s32 %s64, 1
      %s66 = scalar_select %p63, %s64, %s65
      %p69 = pneg %p63
      %p70 = scmp.eq.s32.totalorder %s12, 1
      %p71 = por %p69, %p70
      %p72 = scmp.ne.s32.totalorder %s64, %s67
      %p73 = scmp.eq.s32.totalorder %s12, 0
      %p74 = por %p72, %p73
      %p75 = scmp.ne.s32.totalorder %s64, %s67
      %p76 = scmp.eq.s32.totalorder %s17, 1
      %p77 = por %p75, %p76
      %p78 = scmp.ne.s32.totalorder %s67, %s68
      %p79 = scmp.eq.s32.totalorder %s17, 0
      %p80 = por %p78, %p79
      %p81 = scmp.ne.s32.totalorder %s67, %s68
      %p82 = scmp.eq.s32.totalorder %s18, 1
      %p83 = por %p81, %p82
      %p85 = scmp.ne.s32.totalorder %s68, %s84
      %p86 = scmp.eq.s32.totalorder %s18, 0
      %p87 = por %p85, %p86
      %s88 = ssub.s32 %s12, %s19
      %p89 = scmp.eq.s32.totalorder %s88, 0
      %s91 = sadd.s32 %s90, 1
      %s92 = scalar_select %p89, %s90, %s91
      %p95 = pneg %p89
      %p96 = scmp.eq.s32.totalorder %s12, 1
      %p97 = por %p95, %p96
      %p98 = scmp.ne.s32.totalorder %s90, %s93
      %p99 = scmp.eq.s32.totalorder %s12, 0
      %p100 = por %p98, %p99
      %p101 = scmp.ne.s32.totalorder %s90, %s93
      %p102 = scmp.eq.s32.totalorder %s17, 1
      %p103 = por %p101, %p102
      %p104 = scmp.ne.s32.totalorder %s93, %s94
      %p105 = scmp.eq.s32.totalorder %s17, 0
      %p106 = por %p104, %p105
      %p107 = scmp.ne.s32.totalorder %s93, %s94
      %p108 = scmp.eq.s32.totalorder %s18, 1
      %p109 = por %p107, %p108
      %p111 = scmp.ne.s32.totalorder %s94, %s110
      %p112 = scmp.eq.s32.totalorder %s18, 0
      %p113 = por %p111, %p112
      %s114 = ssub.s32 %s12, %s19
      %p115 = scmp.eq.s32.totalorder %s114, 0
      %s117 = sadd.s32 %s116, 1
      %s118 = scalar_select %p115, %s116, %s117
      %p121 = pneg %p115
      %p122 = scmp.eq.s32.totalorder %s12, 1
      %p123 = por %p121, %p122
      %p124 = scmp.ne.s32.totalorder %s116, %s119
      %p125 = scmp.eq.s32.totalorder %s12, 0
      %p126 = por %p124, %p125
      %p127 = scmp.ne.s32.totalorder %s116, %s119
      %p128 = scmp.eq.s32.totalorder %s17, 1
      %p129 = por %p127, %p128
      %p130 = scmp.ne.s32.totalorder %s119, %s120
      %p131 = scmp.eq.s32.totalorder %s17, 0
      %p132 = por %p130, %p131
      %p133 = scmp.ne.s32.totalorder %s119, %s120
      %p134 = scmp.eq.s32.totalorder %s18, 1
      %p135 = por %p133, %p134
      %p137 = scmp.ne.s32.totalorder %s120, %s136
      %p138 = scmp.eq.s32.totalorder %s18, 0
      %p139 = por %p137, %p138
      %s140 = ssub.s32 %s12, %s19
      %p141 = scmp.eq.s32.totalorder %s140, 0
      %s143 = sadd.s32 %s142, 1
      %s144 = scalar_select %p141, %s142, %s143
      %p147 = pneg %p141
      %p148 = scmp.eq.s32.totalorder %s12, 1
      %p149 = por %p147, %p148
      %p150 = scmp.ne.s32.totalorder %s142, %s145
      %p151 = scmp.eq.s32.totalorder %s12, 0
      %p152 = por %p150, %p151
      %p153 = scmp.ne.s32.totalorder %s142, %s145
      %p154 = scmp.eq.s32.totalorder %s17, 1
      %p155 = por %p153, %p154
      %p156 = scmp.ne.s32.totalorder %s145, %s146
      %p157 = scmp.eq.s32.totalorder %s17, 0
      %p158 = por %p156, %p157
      %p159 = scmp.ne.s32.totalorder %s145, %s146
      %p160 = scmp.eq.s32.totalorder %s18, 1
      %p161 = por %p159, %p160
      %p163 = scmp.ne.s32.totalorder %s146, %s162
      %p164 = scmp.eq.s32.totalorder %s18, 0
      %p165 = por %p163, %p164
      %p166 = scmp.le.s32.totalorder 1, %s12
      %p167 = scmp.lt.s32.totalorder %s12, 3
      %p168 = pnand %p166, %p167
      %p169 = pneg %p168
      // Predicated region
      $region9: #{convlstm_cell_forward.1} parent=5 // pred_check
        _
      $region10: #{convlstm_cell_forward.1} parent=5 // pred_check_branch
        %171 = sbr.rel (%p168) target = $region12
      $region11: #{convlstm_cell_forward.1} parent=5 // pred_region
        %s172 = ssub.s32 %s12, 1
        // Predicated region
        $region13: #{convlstm_cell_forward.1} parent=11 // pred_check
          %p173 = pneg %p33
        $region14: #{convlstm_cell_forward.1} parent=11 // pred_check_branch
          %175 = sbr.rel (%p173) target = $region16
        $region15: #{convlstm_cell_forward.1} parent=11 // pred_region
          _
        $region16: #{convlstm_cell_forward.1} parent=11 // pred_fallthru
          _
        // Predicated region
        $region17: #{convlstm_cell_forward.1} parent=11 // pred_check
          %p176 = pneg %p54
        $region18: #{convlstm_cell_forward.1} parent=11 // pred_check_branch
          %178 = sbr.rel (%p176) target = $region20
        $region19: #{convlstm_cell_forward.1} parent=11 // pred_region
          _
        $region20: #{convlstm_cell_forward.1} parent=11 // pred_fallthru
          _
      $region12: #{convlstm_cell_forward.1} parent=5 // pred_fallthru
        _
      %p179 = scmp.lt.s32.totalorder %s12, 2
      // Predicated region
      $region21: #{convlstm_cell_forward.1} parent=5 // pred_check
        %p180 = pneg %p179
      $region22: #{convlstm_cell_forward.1} parent=5 // pred_check_branch
        %182 = sbr.rel (%p180) target = $region24
      $region23: #{convlstm_cell_forward.1} parent=5 // pred_region
        // Predicated region
        $region25: #{convlstm_cell_forward.1} parent=23 // pred_check
          %p183 = pneg %p74
        $region26: #{convlstm_cell_forward.1} parent=23 // pred_check_branch
          %185 = sbr.rel (%p183) target = $region28
        $region27: #{convlstm_cell_forward.1} parent=23 // pred_region
          %s186 = sand.u32 %s64, 1
          %s187 = sand.u32 %s64, 1
          %s188 = smul.addr %s187, 384
          %s189 = scalar_lea.vmem [#allocation2], %s188
          %s190 = smul.u32 2, %s12
          %s191 = smul.addr %s190, 4
          %s192 = scalar_lea.vmem %s2, %s191
          // Predicated region
          $region29: #{convlstm_cell_forward.1} parent=27 // pred_check
            _
          $region30: #{convlstm_cell_forward.1} parent=27 // pred_check_branch
            %194 = sbr.rel (0) target = $region32
          $region31: #{convlstm_cell_forward.1} parent=27 // pred_region
            // Predicated region
            $region33: #{convlstm_cell_forward.1} parent=31 // pred_check
              _
            $region34: #{convlstm_cell_forward.1} parent=31 // pred_check_branch
              %196 = sbr.rel (0) target = $region36
            $region35: #{convlstm_cell_forward.1} parent=31 // pred_region
              // Predicated region
              $region48: #{convlstm_cell_forward.1} parent=35 // pred_check
                _
              $region49: #{convlstm_cell_forward.1} parent=35 // pred_check_branch
                %305 = sbr.rel (0) target = $region51
              $region50: #{convlstm_cell_forward.1} parent=35 // pred_region
                loop: start=0, step=1, limit=1
                $region52: #{convlstm_cell_forward.1} parent=50 // loop_pre_header
                  _
                $region53: #{convlstm_cell_forward.1} parent=50 // loop_header
                  %s307 = sphi 0, %s311
                  %p308 = scmp.ge.s32.totalorder %s307, 1
                  %s312 = sphi %s192, %s192
                  %s313 = sphi %s189, %s189
                $region54: #{convlstm_cell_forward.1} parent=50 // loop_header_branch
                  %310 = sbr.rel (%p308) target = $region58
                $region55: #{convlstm_cell_forward.1} parent=50 // loop_body
                  %v314 = vld [vmem:[%s312] sm:$0xff]
                  %315 = vst [vmem:[%s313] sm:$0xff] %v314
                  %v316 = vld [vmem:[%s312 + $0x10] sm:$0xff]
                  %317 = vst [vmem:[%s313 + $0x8] sm:$0xff] %v316
                  %v318 = vld [vmem:[%s312 + $0x20] sm:$0xff]
                  %319 = vst [vmem:[%s313 + $0x10] sm:$0xff] %v318
                  %v320 = vld [vmem:[%s312 + $0x30] sm:$0xff]
                  %321 = vst [vmem:[%s313 + $0x18] sm:$0xff] %v320
                  %v322 = vld [vmem:[%s312 + $0x40] sm:$0xff]
                  %323 = vst [vmem:[%s313 + $0x20] sm:$0xff] %v322
                  %v324 = vld [vmem:[%s312 + $0x50] sm:$0xff]
                  %325 = vst [vmem:[%s313 + $0x28] sm:$0xff] %v324
                  %v326 = vld [vmem:[%s312 + $0x60] sm:$0xff]
                  %327 = vst [vmem:[%s313 + $0x30] sm:$0xff] %v326
                  %v328 = vld [vmem:[%s312 + $0x70] sm:$0xff]
                  %329 = vst [vmem:[%s313 + $0x38] sm:$0xff] %v328
                  %v330 = vld [vmem:[%s312 + $0x80] sm:$0xff]
                  %331 = vst [vmem:[%s313 + $0x40] sm:$0xff] %v330
                  %v332 = vld [vmem:[%s312 + $0x90] sm:$0xff]
                  %333 = vst [vmem:[%s313 + $0x48] sm:$0xff] %v332
                  %v334 = vld [vmem:[%s312 + $0xa0] sm:$0xff]
                  %335 = vst [vmem:[%s313 + $0x50] sm:$0xff] %v334
                  %v336 = vld [vmem:[%s312 + $0xb0] sm:$0xff]
                  %337 = vst [vmem:[%s313 + $0x58] sm:$0xff] %v336
                  %v338 = vld [vmem:[%s312 + $0xc0] sm:$0xff]
                  %339 = vst [vmem:[%s313 + $0x60] sm:$0xff] %v338
                  %v340 = vld [vmem:[%s312 + $0xd0] sm:$0xff]
                  %341 = vst [vmem:[%s313 + $0x68] sm:$0xff] %v340
                  %v342 = vld [vmem:[%s312 + $0xe0] sm:$0xff]
                  %343 = vst [vmem:[%s313 + $0x70] sm:$0xff] %v342
                  %v344 = vld [vmem:[%s312 + $0xf0] sm:$0xff]
                  %345 = vst [vmem:[%s313 + $0x78] sm:$0xff] %v344
                  %v346 = vld [vmem:[%s312 + $0x100] sm:$0xff]
                  %347 = vst [vmem:[%s313 + $0x80] sm:$0xff] %v346
                  %v348 = vld [vmem:[%s312 + $0x110] sm:$0xff]
                  %349 = vst [vmem:[%s313 + $0x88] sm:$0xff] %v348
                  %v350 = vld [vmem:[%s312 + $0x120] sm:$0xff]
                  %351 = vst [vmem:[%s313 + $0x90] sm:$0xff] %v350
                  %v352 = vld [vmem:[%s312 + $0x130] sm:$0xff]
                  %353 = vst [vmem:[%s313 + $0x98] sm:$0xff] %v352
                  %v354 = vld [vmem:[%s312 + $0x140] sm:$0xff]
                  %355 = vst [vmem:[%s313 + $0xa0] sm:$0xff] %v354
                  %v356 = vld [vmem:[%s312 + $0x150] sm:$0xff]
                  %357 = vst [vmem:[%s313 + $0xa8] sm:$0xff] %v356
                  %v358 = vld [vmem:[%s312 + $0x160] sm:$0xff]
                  %359 = vst [vmem:[%s313 + $0xb0] sm:$0xff] %v358
                  %v360 = vld [vmem:[%s312 + $0x170] sm:$0xff]
                  %361 = vst [vmem:[%s313 + $0xb8] sm:$0xff] %v360
                  %v362 = vld [vmem:[%s312 + $0x180] sm:$0xff]
                  %363 = vst [vmem:[%s313 + $0xc0] sm:$0xff] %v362
                  %v364 = vld [vmem:[%s312 + $0x190] sm:$0xff]
                  %365 = vst [vmem:[%s313 + $0xc8] sm:$0xff] %v364
                  %v366 = vld [vmem:[%s312 + $0x1a0] sm:$0xff]
                  %367 = vst [vmem:[%s313 + $0xd0] sm:$0xff] %v366
                  %v368 = vld [vmem:[%s312 + $0x1b0] sm:$0xff]
                  %369 = vst [vmem:[%s313 + $0xd8] sm:$0xff] %v368
                  %v370 = vld [vmem:[%s312 + $0x1c0] sm:$0xff]
                  %371 = vst [vmem:[%s313 + $0xe0] sm:$0xff] %v370
                  %v372 = vld [vmem:[%s312 + $0x1d0] sm:$0xff]
                  %373 = vst [vmem:[%s313 + $0xe8] sm:$0xff] %v372
                  %v374 = vld [vmem:[%s312 + $0x1e0] sm:$0xff]
                  %375 = vst [vmem:[%s313 + $0xf0] sm:$0xff] %v374
                  %v376 = vld [vmem:[%s312 + $0x1f0] sm:$0xff]
                  %377 = vst [vmem:[%s313 + $0xf8] sm:$0xff] %v376
                  %v378 = vld [vmem:[%s312 + $0x200] sm:$0xff]
                  %379 = vst [vmem:[%s313 + $0x100] sm:$0xff] %v378
                  %v380 = vld [vmem:[%s312 + $0x210] sm:$0xff]
                  %381 = vst [vmem:[%s313 + $0x108] sm:$0xff] %v380
                  %v382 = vld [vmem:[%s312 + $0x220] sm:$0xff]
                  %383 = vst [vmem:[%s313 + $0x110] sm:$0xff] %v382
                  %v384 = vld [vmem:[%s312 + $0x230] sm:$0xff]
                  %385 = vst [vmem:[%s313 + $0x118] sm:$0xff] %v384
                  %v386 = vld [vmem:[%s312 + $0x240] sm:$0xff]
                  %387 = vst [vmem:[%s313 + $0x120] sm:$0xff] %v386
                  %v388 = vld [vmem:[%s312 + $0x250] sm:$0xff]
                  %389 = vst [vmem:[%s313 + $0x128] sm:$0xff] %v388
                  %v390 = vld [vmem:[%s312 + $0x260] sm:$0xff]
                  %391 = vst [vmem:[%s313 + $0x130] sm:$0xff] %v390
                  %v392 = vld [vmem:[%s312 + $0x270] sm:$0xff]
                  %393 = vst [vmem:[%s313 + $0x138] sm:$0xff] %v392
                  %v394 = vld [vmem:[%s312 + $0x280] sm:$0xff]
                  %395 = vst [vmem:[%s313 + $0x140] sm:$0xff] %v394
                  %v396 = vld [vmem:[%s312 + $0x290] sm:$0xff]
                  %397 = vst [vmem:[%s313 + $0x148] sm:$0xff] %v396
                  %v398 = vld [vmem:[%s312 + $0x2a0] sm:$0xff]
                  %399 = vst [vmem:[%s313 + $0x150] sm:$0xff] %v398
                  %v400 = vld [vmem:[%s312 + $0x2b0] sm:$0xff]
                  %401 = vst [vmem:[%s313 + $0x158] sm:$0xff] %v400
                  %v402 = vld [vmem:[%s312 + $0x2c0] sm:$0xff]
                  %403 = vst [vmem:[%s313 + $0x160] sm:$0xff] %v402
                  %v404 = vld [vmem:[%s312 + $0x2d0] sm:$0xff]
                  %405 = vst [vmem:[%s313 + $0x168] sm:$0xff] %v404
                  %v406 = vld [vmem:[%s312 + $0x2e0] sm:$0xff]
                  %407 = vst [vmem:[%s313 + $0x170] sm:$0xff] %v406
                  %v408 = vld [vmem:[%s312 + $0x2f0] sm:$0xff]
                  %409 = vst [vmem:[%s313 + $0x178] sm:$0xff] %v408
                $region56: #{convlstm_cell_forward.1} parent=50 // loop_footer
                  %s311 = sadd.s32 1, %s307
                $region57: #{convlstm_cell_forward.1} parent=50 // loop_footer_branch
                  %306 = sbr.rel target = $region53
                $region58: #{convlstm_cell_forward.1} parent=50 // loop_exit
                  _
              $region51: #{convlstm_cell_forward.1} parent=35 // pred_fallthru
                _
              // Predicated region
              $region59: #{convlstm_cell_forward.1} parent=35 // pred_check
                _
              $region60: #{convlstm_cell_forward.1} parent=35 // pred_check_branch
                %411 = sbr.rel target = $region62
              $region61: #{convlstm_cell_forward.1} parent=35 // pred_region
                _
              $region62: #{convlstm_cell_forward.1} parent=35 // pred_fallthru
                _
            $region36: #{convlstm_cell_forward.1} parent=31 // pred_fallthru
              _
            // Predicated region
            $region37: #{convlstm_cell_forward.1} parent=31 // pred_check
              _
            $region38: #{convlstm_cell_forward.1} parent=31 // pred_check_branch
              %198 = sbr.rel target = $region40
            $region39: #{convlstm_cell_forward.1} parent=31 // pred_region
              loop: start=0, step=1, limit=1
              $region41: #{convlstm_cell_forward.1} parent=39 // loop_pre_header
                _
              $region42: #{convlstm_cell_forward.1} parent=39 // loop_header
                %s201 = sphi 0, %s205
                %p202 = scmp.ge.s32.totalorder %s201, 1
                %s206 = sphi %s192, %s192
                %s207 = sphi %s189, %s189
              $region43: #{convlstm_cell_forward.1} parent=39 // loop_header_branch
                %204 = sbr.rel (%p202) target = $region47
              $region44: #{convlstm_cell_forward.1} parent=39 // loop_body
                %v208 = vld [vmem:[%s206] sm:$0xff]
                %209 = vst [vmem:[%s207] sm:$0xff] %v208
                %v210 = vld [vmem:[%s206 + $0x10] sm:$0xff]
                %211 = vst [vmem:[%s207 + $0x8] sm:$0xff] %v210
                %v212 = vld [vmem:[%s206 + $0x20] sm:$0xff]
                %213 = vst [vmem:[%s207 + $0x10] sm:$0xff] %v212
                %v214 = vld [vmem:[%s206 + $0x30] sm:$0xff]
                %215 = vst [vmem:[%s207 + $0x18] sm:$0xff] %v214
                %v216 = vld [vmem:[%s206 + $0x40] sm:$0xff]
                %217 = vst [vmem:[%s207 + $0x20] sm:$0xff] %v216
                %v218 = vld [vmem:[%s206 + $0x50] sm:$0xff]
                %219 = vst [vmem:[%s207 + $0x28] sm:$0xff] %v218
                %v220 = vld [vmem:[%s206 + $0x60] sm:$0xff]
                %221 = vst [vmem:[%s207 + $0x30] sm:$0xff] %v220
                %v222 = vld [vmem:[%s206 + $0x70] sm:$0xff]
                %223 = vst [vmem:[%s207 + $0x38] sm:$0xff] %v222
                %v224 = vld [vmem:[%s206 + $0x80] sm:$0xff]
                %225 = vst [vmem:[%s207 + $0x40] sm:$0xff] %v224
                %v226 = vld [vmem:[%s206 + $0x90] sm:$0xff]
                %227 = vst [vmem:[%s207 + $0x48] sm:$0xff] %v226
                %v228 = vld [vmem:[%s206 + $0xa0] sm:$0xff]
                %229 = vst [vmem:[%s207 + $0x50] sm:$0xff] %v228
                %v230 = vld [vmem:[%s206 + $0xb0] sm:$0xff]
                %231 = vst [vmem:[%s207 + $0x58] sm:$0xff] %v230
                %v232 = vld [vmem:[%s206 + $0xc0] sm:$0xff]
                %233 = vst [vmem:[%s207 + $0x60] sm:$0xff] %v232
                %v234 = vld [vmem:[%s206 + $0xd0] sm:$0xff]
                %235 = vst [vmem:[%s207 + $0x68] sm:$0xff] %v234
                %v236 = vld [vmem:[%s206 + $0xe0] sm:$0xff]
                %237 = vst [vmem:[%s207 + $0x70] sm:$0xff] %v236
                %v238 = vld [vmem:[%s206 + $0xf0] sm:$0xff]
                %239 = vst [vmem:[%s207 + $0x78] sm:$0xff] %v238
                %v240 = vld [vmem:[%s206 + $0x100] sm:$0xff]
                %241 = vst [vmem:[%s207 + $0x80] sm:$0xff] %v240
                %v242 = vld [vmem:[%s206 + $0x110] sm:$0xff]
                %243 = vst [vmem:[%s207 + $0x88] sm:$0xff] %v242
                %v244 = vld [vmem:[%s206 + $0x120] sm:$0xff]
                %245 = vst [vmem:[%s207 + $0x90] sm:$0xff] %v244
                %v246 = vld [vmem:[%s206 + $0x130] sm:$0xff]
                %247 = vst [vmem:[%s207 + $0x98] sm:$0xff] %v246
                %v248 = vld [vmem:[%s206 + $0x140] sm:$0xff]
                %249 = vst [vmem:[%s207 + $0xa0] sm:$0xff] %v248
                %v250 = vld [vmem:[%s206 + $0x150] sm:$0xff]
                %251 = vst [vmem:[%s207 + $0xa8] sm:$0xff] %v250
                %v252 = vld [vmem:[%s206 + $0x160] sm:$0xff]
                %253 = vst [vmem:[%s207 + $0xb0] sm:$0xff] %v252
                %v254 = vld [vmem:[%s206 + $0x170] sm:$0xff]
                %255 = vst [vmem:[%s207 + $0xb8] sm:$0xff] %v254
                %v256 = vld [vmem:[%s206 + $0x180] sm:$0xff]
                %257 = vst [vmem:[%s207 + $0xc0] sm:$0xff] %v256
                %v258 = vld [vmem:[%s206 + $0x190] sm:$0xff]
                %259 = vst [vmem:[%s207 + $0xc8] sm:$0xff] %v258
                %v260 = vld [vmem:[%s206 + $0x1a0] sm:$0xff]
                %261 = vst [vmem:[%s207 + $0xd0] sm:$0xff] %v260
                %v262 = vld [vmem:[%s206 + $0x1b0] sm:$0xff]
                %263 = vst [vmem:[%s207 + $0xd8] sm:$0xff] %v262
                %v264 = vld [vmem:[%s206 + $0x1c0] sm:$0xff]
                %265 = vst [vmem:[%s207 + $0xe0] sm:$0xff] %v264
                %v266 = vld [vmem:[%s206 + $0x1d0] sm:$0xff]
                %267 = vst [vmem:[%s207 + $0xe8] sm:$0xff] %v266
                %v268 = vld [vmem:[%s206 + $0x1e0] sm:$0xff]
                %269 = vst [vmem:[%s207 + $0xf0] sm:$0xff] %v268
                %v270 = vld [vmem:[%s206 + $0x1f0] sm:$0xff]
                %271 = vst [vmem:[%s207 + $0xf8] sm:$0xff] %v270
                %v272 = vld [vmem:[%s206 + $0x200] sm:$0xff]
                %273 = vst [vmem:[%s207 + $0x100] sm:$0xff] %v272
                %v274 = vld [vmem:[%s206 + $0x210] sm:$0xff]
                %275 = vst [vmem:[%s207 + $0x108] sm:$0xff] %v274
                %v276 = vld [vmem:[%s206 + $0x220] sm:$0xff]
                %277 = vst [vmem:[%s207 + $0x110] sm:$0xff] %v276
                %v278 = vld [vmem:[%s206 + $0x230] sm:$0xff]
                %279 = vst [vmem:[%s207 + $0x118] sm:$0xff] %v278
                %v280 = vld [vmem:[%s206 + $0x240] sm:$0xff]
                %281 = vst [vmem:[%s207 + $0x120] sm:$0xff] %v280
                %v282 = vld [vmem:[%s206 + $0x250] sm:$0xff]
                %283 = vst [vmem:[%s207 + $0x128] sm:$0xff] %v282
                %v284 = vld [vmem:[%s206 + $0x260] sm:$0xff]
                %285 = vst [vmem:[%s207 + $0x130] sm:$0xff] %v284
                %v286 = vld [vmem:[%s206 + $0x270] sm:$0xff]
                %287 = vst [vmem:[%s207 + $0x138] sm:$0xff] %v286
                %v288 = vld [vmem:[%s206 + $0x280] sm:$0xff]
                %289 = vst [vmem:[%s207 + $0x140] sm:$0xff] %v288
                %v290 = vld [vmem:[%s206 + $0x290] sm:$0xff]
                %291 = vst [vmem:[%s207 + $0x148] sm:$0xff] %v290
                %v292 = vld [vmem:[%s206 + $0x2a0] sm:$0xff]
                %293 = vst [vmem:[%s207 + $0x150] sm:$0xff] %v292
                %v294 = vld [vmem:[%s206 + $0x2b0] sm:$0xff]
                %295 = vst [vmem:[%s207 + $0x158] sm:$0xff] %v294
                %v296 = vld [vmem:[%s206 + $0x2c0] sm:$0xff]
                %297 = vst [vmem:[%s207 + $0x160] sm:$0xff] %v296
                %v298 = vld [vmem:[%s206 + $0x2d0] sm:$0xff]
                %299 = vst [vmem:[%s207 + $0x168] sm:$0xff] %v298
                %v300 = vld [vmem:[%s206 + $0x2e0] sm:$0xff]
                %301 = vst [vmem:[%s207 + $0x170] sm:$0xff] %v300
                %v302 = vld [vmem:[%s206 + $0x2f0] sm:$0xff]
                %303 = vst [vmem:[%s207 + $0x178] sm:$0xff] %v302
              $region45: #{convlstm_cell_forward.1} parent=39 // loop_footer
                %s205 = sadd.s32 1, %s201
              $region46: #{convlstm_cell_forward.1} parent=39 // loop_footer_branch
                %200 = sbr.rel target = $region42
              $region47: #{convlstm_cell_forward.1} parent=39 // loop_exit
                _
            $region40: #{convlstm_cell_forward.1} parent=31 // pred_fallthru
              _
          $region32: #{convlstm_cell_forward.1} parent=27 // pred_fallthru
            _
          %412 = vnop
        $region28: #{convlstm_cell_forward.1} parent=23 // pred_fallthru
          _
        // Predicated region
        $region63: #{convlstm_cell_forward.1} parent=23 // pred_check
          %p413 = pneg %p100
        $region64: #{convlstm_cell_forward.1} parent=23 // pred_check_branch
          %415 = sbr.rel (%p413) target = $region66
        $region65: #{convlstm_cell_forward.1} parent=23 // pred_region
          %s416 = sand.u32 %s90, 1
          %s417 = sand.u32 %s90, 1
          %s418 = smul.addr %s417, 64
          %s419 = scalar_lea.vmem [#allocation3], %s418
          %s420 = smul.u32 2, %s12
          %s421 = smul.addr %s420, 8
          %s422 = scalar_lea.vmem %s3, %s421
          // Predicated region
          $region67: #{convlstm_cell_forward.1} parent=65 // pred_check
            _
          $region68: #{convlstm_cell_forward.1} parent=65 // pred_check_branch
            %424 = sbr.rel (0) target = $region70
          $region69: #{convlstm_cell_forward.1} parent=65 // pred_region
            // Predicated region
            $region71: #{convlstm_cell_forward.1} parent=69 // pred_check
              _
            $region72: #{convlstm_cell_forward.1} parent=69 // pred_check_branch
              %426 = sbr.rel (0) target = $region74
            $region73: #{convlstm_cell_forward.1} parent=69 // pred_region
              loop: start=0, step=1, limit=1
              $region75: #{convlstm_cell_forward.1} parent=73 // loop_pre_header
                _
              $region76: #{convlstm_cell_forward.1} parent=73 // loop_header
                %s428 = sphi 0, %s432
                %p429 = scmp.ge.s32.totalorder %s428, 1
                %s433 = sphi %s422, %s422
                %s434 = sphi %s419, %s419
              $region77: #{convlstm_cell_forward.1} parent=73 // loop_header_branch
                %431 = sbr.rel (%p429) target = $region81
              $region78: #{convlstm_cell_forward.1} parent=73 // loop_body
                %v435 = vld [vmem:[%s433] sm:$0xff]
                %436 = vst [vmem:[%s434] sm:$0xff] %v435
                %v437 = vld [vmem:[%s433 + $0x8] sm:$0xff]
                %438 = vst [vmem:[%s434 + $0x8] sm:$0xff] %v437
                %v439 = vld [vmem:[%s433 + $0x20] sm:$0xff]
                %440 = vst [vmem:[%s434 + $0x10] sm:$0xff] %v439
                %v441 = vld [vmem:[%s433 + $0x28] sm:$0xff]
                %442 = vst [vmem:[%s434 + $0x18] sm:$0xff] %v441
                %v443 = vld [vmem:[%s433 + $0x40] sm:$0xff]
                %444 = vst [vmem:[%s434 + $0x20] sm:$0xff] %v443
                %v445 = vld [vmem:[%s433 + $0x48] sm:$0xff]
                %446 = vst [vmem:[%s434 + $0x28] sm:$0xff] %v445
                %v447 = vld [vmem:[%s433 + $0x60] sm:$0xff]
                %448 = vst [vmem:[%s434 + $0x30] sm:$0xff] %v447
                %v449 = vld [vmem:[%s433 + $0x68] sm:$0xff]
                %450 = vst [vmem:[%s434 + $0x38] sm:$0xff] %v449
              $region79: #{convlstm_cell_forward.1} parent=73 // loop_footer
                %s432 = sadd.s32 1, %s428
              $region80: #{convlstm_cell_forward.1} parent=73 // loop_footer_branch
                %427 = sbr.rel target = $region76
              $region81: #{convlstm_cell_forward.1} parent=73 // loop_exit
                _
            $region74: #{convlstm_cell_forward.1} parent=69 // pred_fallthru
              _
            // Predicated region
            $region82: #{convlstm_cell_forward.1} parent=69 // pred_check
              _
            $region83: #{convlstm_cell_forward.1} parent=69 // pred_check_branch
              %452 = sbr.rel target = $region85
            $region84: #{convlstm_cell_forward.1} parent=69 // pred_region
              _
            $region85: #{convlstm_cell_forward.1} parent=69 // pred_fallthru
              _
          $region70: #{convlstm_cell_forward.1} parent=65 // pred_fallthru
            _
          %453 = vnop
        $region66: #{convlstm_cell_forward.1} parent=23 // pred_fallthru
          _
      $region24: #{convlstm_cell_forward.1} parent=5 // pred_fallthru
        _
      %p454 = scmp.le.s32.totalorder 1, %s12
      %p455 = scmp.lt.s32.totalorder %s12, 3
      %p456 = pnand %p454, %p455
      %p457 = pneg %p456
      // Predicated region
      $region86: #{convlstm_cell_forward.1} parent=5 // pred_check
        _
      $region87: #{convlstm_cell_forward.1} parent=5 // pred_check_branch
        %459 = sbr.rel (%p456) target = $region89
      $region88: #{convlstm_cell_forward.1} parent=5 // pred_region
        %s460 = ssub.s32 %s12, 1
        %s461 = sand.u32 %s67, 1
        %s462 = sand.u32 %s67, 1
        %s463 = smul.addr %s462, 384
        %s464 = scalar_lea.vmem [#allocation2], %s463
        // Predicated region
        $region90: #{convlstm_cell_forward.1} parent=88 // pred_check
          %p465 = pneg %p80
        $region91: #{convlstm_cell_forward.1} parent=88 // pred_check_branch
          %467 = sbr.rel (%p465) target = $region93
        $region92: #{convlstm_cell_forward.1} parent=88 // pred_region
          _
        $region93: #{convlstm_cell_forward.1} parent=88 // pred_fallthru
          _
        %s468 = sand.u32 %s93, 1
        %s469 = sand.u32 %s93, 1
        %s470 = smul.addr %s469, 64
        %s471 = scalar_lea.vmem [#allocation3], %s470
        // Predicated region
        $region94: #{convlstm_cell_forward.1} parent=88 // pred_check
          %p472 = pneg %p106
        $region95: #{convlstm_cell_forward.1} parent=88 // pred_check_branch
          %474 = sbr.rel (%p472) target = $region97
        $region96: #{convlstm_cell_forward.1} parent=88 // pred_region
          _
        $region97: #{convlstm_cell_forward.1} parent=88 // pred_fallthru
          _
        %p475 = pneg %p33
        %p476 = pneg %p30
        %p477 = pneg %p54
        %p478 = pneg %p51
        %s479 = sand.u32 %s67, 1
        %s480 = sand.u32 %s67, 1
        %s481 = smul.addr %s480, 384
        %s482 = scalar_lea.vmem [#allocation2], %s481
        %p483 = pneg %p80
        %p484 = pneg %p77
        %s485 = sand.u32 %s93, 1
        %s486 = sand.u32 %s93, 1
        %s487 = smul.addr %s486, 64
        %s488 = scalar_lea.vmem [#allocation3], %s487
        %p489 = pneg %p106
        %p490 = pneg %p103
        %p491 = pneg %p132
        %p492 = pneg %p129
        %s493 = sand.u32 %s119, 1
        %s494 = sand.u32 %s119, 1
        %s495 = smul.addr %s494, 64
        %s496 = scalar_lea.vmem [#allocation4], %s495
        %p497 = pneg %p158
        %p498 = pneg %p155
        %s499 = sand.u32 %s145, 1
        %s500 = sand.u32 %s145, 1
        %s501 = smul.addr %s500, 64
        %s502 = scalar_lea.vmem [#allocation5], %s501
        %s503 = smul.u32 2, %s17
        %s504 = smul.u32 2, %s17
        %s505 = smul.u32 2, %s17
        %s506 = smul.u32 2, %s17
        %v508 = vld [vmem:[%s0] sm:$0xff]
        %v509 = vld [vmem:[%s0 + $0x8] sm:$0xf]
        %v510 = vld [vmem:[%s0 + $0xc] sm:$0xff]
        %v511 = vld [vmem:[%s0 + $0x14] sm:$0xf]
        %v512 = vld [vmem:[%s0 + $0x18] sm:$0xff]
        %v513 = vld [vmem:[%s0 + $0x20] sm:$0xf]
        %v514 = vld [vmem:[%s0 + $0x24] sm:$0xff]
        %v515 = vld [vmem:[%s0 + $0x2c] sm:$0xf]
        %v516 = vld [vmem:[%s0 + $0x30] sm:$0xff]
        %v517 = vld [vmem:[%s0 + $0x38] sm:$0xf]
        %v518 = vld [vmem:[%s0 + $0x3c] sm:$0xff]
        %v519 = vld [vmem:[%s0 + $0x44] sm:$0xf]
        %v520 = vld [vmem:[%s0 + $0x48] sm:$0xff]
        %v521 = vld [vmem:[%s0 + $0x50] sm:$0xf]
        %v522 = vld [vmem:[%s0 + $0x54] sm:$0xff]
        %v523 = vld [vmem:[%s0 + $0x5c] sm:$0xf]
        %v524 = vld [vmem:[%s0 + $0x60] sm:$0xff]
        %v525 = vld [vmem:[%s0 + $0x68] sm:$0xf]
        %v526 = vld [vmem:[%s0 + $0x6c] sm:$0xff]
        %v527 = vld [vmem:[%s0 + $0x74] sm:$0xf]
        %v528 = vld [vmem:[%s0 + $0x78] sm:$0xff]
        %v529 = vld [vmem:[%s0 + $0x80] sm:$0xf]
        %v530 = vld [vmem:[%s0 + $0x84] sm:$0xff]
        %v531 = vld [vmem:[%s0 + $0x8c] sm:$0xf]
        %v532 = vld [vmem:[%s0 + $0x90] sm:$0xff]
        %v533 = vld [vmem:[%s0 + $0x98] sm:$0xf]
        %v534 = vld [vmem:[%s0 + $0x9c] sm:$0xff]
        %v535 = vld [vmem:[%s0 + $0xa4] sm:$0xf]
        %v536 = vld [vmem:[%s0 + $0xa8] sm:$0xff]
        %v537 = vld [vmem:[%s0 + $0xb0] sm:$0xf]
        %v538 = vld [vmem:[%s0 + $0xb4] sm:$0xff]
        %v539 = vld [vmem:[%s0 + $0xbc] sm:$0xf]
        %v540 = vld [vmem:[%s464] sm:$0xff]
        %v541 = vld [vmem:[%s464 + $0x8] sm:$0xff]
        %v542 = vld [vmem:[%s464 + $0x10] sm:$0xff]
        %v543 = vld [vmem:[%s464 + $0x18] sm:$0xff]
        %v544 = vld [vmem:[%s464 + $0x20] sm:$0xff]
        %v545 = vld [vmem:[%s464 + $0x28] sm:$0xff]
        %v546 = vld [vmem:[%s464 + $0x30] sm:$0xff]
        %v547 = vld [vmem:[%s464 + $0x38] sm:$0xff]
        %v548 = vld [vmem:[%s464 + $0x40] sm:$0xff]
        %v549 = vld [vmem:[%s464 + $0x48] sm:$0xff]
        %v550 = vld [vmem:[%s464 + $0x50] sm:$0xff]
        %v551 = vld [vmem:[%s464 + $0x58] sm:$0xff]
        %v552 = vld [vmem:[%s464 + $0x60] sm:$0xff]
        %v553 = vld [vmem:[%s464 + $0x68] sm:$0xff]
        %v554 = vld [vmem:[%s464 + $0x70] sm:$0xff]
        %v555 = vld [vmem:[%s464 + $0x78] sm:$0xff]
        %v556 = vld [vmem:[%s464 + $0x80] sm:$0xff]
        %v557 = vld [vmem:[%s464 + $0x88] sm:$0xff]
        %v558 = vld [vmem:[%s464 + $0x90] sm:$0xff]
        %v559 = vld [vmem:[%s464 + $0x98] sm:$0xff]
        %v560 = vld [vmem:[%s464 + $0xa0] sm:$0xff]
        %v561 = vld [vmem:[%s464 + $0xa8] sm:$0xff]
        %v562 = vld [vmem:[%s464 + $0xb0] sm:$0xff]
        %v563 = vld [vmem:[%s464 + $0xb8] sm:$0xff]
        %v564 = vld [vmem:[%s464 + $0xc0] sm:$0xff]
        %v565 = vld [vmem:[%s464 + $0xc8] sm:$0xff]
        %v566 = vld [vmem:[%s464 + $0xd0] sm:$0xff]
        %v567 = vld [vmem:[%s464 + $0xd8] sm:$0xff]
        %v568 = vld [vmem:[%s464 + $0xe0] sm:$0xff]
        %v569 = vld [vmem:[%s464 + $0xe8] sm:$0xff]
        %v570 = vld [vmem:[%s464 + $0xf0] sm:$0xff]
        %v571 = vld [vmem:[%s464 + $0xf8] sm:$0xff]
        %v572 = vld [vmem:[%s464 + $0x100] sm:$0xff]
        %v573 = vld [vmem:[%s464 + $0x108] sm:$0xff]
        %v574 = vld [vmem:[%s464 + $0x110] sm:$0xff]
        %v575 = vld [vmem:[%s464 + $0x118] sm:$0xff]
        %v576 = vld [vmem:[%s464 + $0x120] sm:$0xff]
        %v577 = vld [vmem:[%s464 + $0x128] sm:$0xff]
        %v578 = vld [vmem:[%s464 + $0x130] sm:$0xff]
        %v579 = vld [vmem:[%s464 + $0x138] sm:$0xff]
        %v580 = vld [vmem:[%s464 + $0x140] sm:$0xff]
        %v581 = vld [vmem:[%s464 + $0x148] sm:$0xff]
        %v582 = vld [vmem:[%s464 + $0x150] sm:$0xff]
        %v583 = vld [vmem:[%s464 + $0x158] sm:$0xff]
        %v584 = vld [vmem:[%s464 + $0x160] sm:$0xff]
        %v585 = vld [vmem:[%s464 + $0x168] sm:$0xff]
        %v586 = vld [vmem:[%s464 + $0x170] sm:$0xff]
        %v587 = vld [vmem:[%s464 + $0x178] sm:$0xff]
        %v588 = vld [vmem:[%s1] sm:$0xff]
        %v589 = vld [vmem:[%s1 + $0x8] sm:$0xff]
        %v590 = vld [vmem:[%s1 + $0x10] sm:$0xff]
        %v591 = vld [vmem:[%s1 + $0x18] sm:$0xff]
        %v592 = vld [vmem:[%s1 + $0x20] sm:$0xff]
        %v593 = vld [vmem:[%s1 + $0x28] sm:$0xff]
        %v594 = vld [vmem:[%s1 + $0x30] sm:$0xff]
        %v595 = vld [vmem:[%s1 + $0x38] sm:$0xff]
        %v596 = vld [vmem:[%s1 + $0x40] sm:$0xff]
        %v597 = vld [vmem:[%s1 + $0x48] sm:$0xff]
        %v598 = vld [vmem:[%s1 + $0x50] sm:$0xff]
        %v599 = vld [vmem:[%s1 + $0x58] sm:$0xff]
        %v600 = vld [vmem:[%s1 + $0x60] sm:$0xff]
        %v601 = vld [vmem:[%s1 + $0x68] sm:$0xff]
        %v602 = vld [vmem:[%s1 + $0x70] sm:$0xff]
        %v603 = vld [vmem:[%s1 + $0x78] sm:$0xff]
        %605 = vset.pattern.permute.xlu0 0
        %606 = vperm.xlu0 %605, %v588
        %v607 = vpop.permute.xlu0 %606
        %610 = vset.pattern.permute.xlu0 0
        %611 = vperm.xlu0 %610, %v589
        %v612 = vpop.permute.xlu0 %611
        %615 = vset.pattern.permute.xlu0 0
        %616 = vperm.xlu0 %615, %v590
        %v617 = vpop.permute.xlu0 %616
        %620 = vset.pattern.permute.xlu0 0
        %621 = vperm.xlu0 %620, %v591
        %v622 = vpop.permute.xlu0 %621
        %625 = vset.pattern.permute.xlu0 0
        %626 = vperm.xlu0 %625, %v592
        %v627 = vpop.permute.xlu0 %626
        %630 = vset.pattern.permute.xlu0 0
        %631 = vperm.xlu0 %630, %v593
        %v632 = vpop.permute.xlu0 %631
        %635 = vset.pattern.permute.xlu0 0
        %636 = vperm.xlu0 %635, %v594
        %v637 = vpop.permute.xlu0 %636
        %640 = vset.pattern.permute.xlu0 0
        %641 = vperm.xlu0 %640, %v595
        %v642 = vpop.permute.xlu0 %641
        %645 = vset.pattern.permute.xlu0 0
        %646 = vperm.xlu0 %645, %v596
        %v647 = vpop.permute.xlu0 %646
        %650 = vset.pattern.permute.xlu0 0
        %651 = vperm.xlu0 %650, %v597
        %v652 = vpop.permute.xlu0 %651
        %655 = vset.pattern.permute.xlu0 0
        %656 = vperm.xlu0 %655, %v598
        %v657 = vpop.permute.xlu0 %656
        %660 = vset.pattern.permute.xlu0 0
        %661 = vperm.xlu0 %660, %v599
        %v662 = vpop.permute.xlu0 %661
        %665 = vset.pattern.permute.xlu0 0
        %666 = vperm.xlu0 %665, %v600
        %v667 = vpop.permute.xlu0 %666
        %670 = vset.pattern.permute.xlu0 0
        %671 = vperm.xlu0 %670, %v601
        %v672 = vpop.permute.xlu0 %671
        %675 = vset.pattern.permute.xlu0 0
        %676 = vperm.xlu0 %675, %v602
        %v677 = vpop.permute.xlu0 %676
        %680 = vset.pattern.permute.xlu0 0
        %681 = vperm.xlu0 %680, %v603
        %v682 = vpop.permute.xlu0 %681
        %v716 = vunpack.c.l.b16 %v508
        %v717 = vunpack.c.h.b16 %v508
        %v718 = vunpack.c.l.b16 %v509
        %v719 = vunpack.c.l.b16 %v510
        %v720 = vunpack.c.h.b16 %v510
        %v721 = vunpack.c.l.b16 %v511
        %v722 = vunpack.c.l.b16 %v512
        %v723 = vunpack.c.h.b16 %v512
        %v724 = vunpack.c.l.b16 %v513
        %v725 = vunpack.c.l.b16 %v514
        %v726 = vunpack.c.h.b16 %v514
        %v727 = vunpack.c.l.b16 %v515
        %v728 = vunpack.c.l.b16 %v516
        %v729 = vunpack.c.h.b16 %v516
        %v730 = vunpack.c.l.b16 %v517
        %v731 = vunpack.c.l.b16 %v518
        %v732 = vunpack.c.h.b16 %v518
        %v733 = vunpack.c.l.b16 %v519
        %v734 = vunpack.c.l.b16 %v520
        %v735 = vunpack.c.h.b16 %v520
        %v736 = vunpack.c.l.b16 %v521
        %v737 = vunpack.c.l.b16 %v522
        %v738 = vunpack.c.h.b16 %v522
        %v739 = vunpack.c.l.b16 %v523
        %v740 = vunpack.c.l.b16 %v524
        %v741 = vunpack.c.h.b16 %v524
        %v742 = vunpack.c.l.b16 %v525
        %v743 = vunpack.c.l.b16 %v526
        %v744 = vunpack.c.h.b16 %v526
        %v745 = vunpack.c.l.b16 %v527
        %v746 = vunpack.c.l.b16 %v528
        %v747 = vunpack.c.h.b16 %v528
        %v748 = vunpack.c.l.b16 %v529
        %v749 = vunpack.c.l.b16 %v530
        %v750 = vunpack.c.h.b16 %v530
        %v751 = vunpack.c.l.b16 %v531
        %v752 = vunpack.c.l.b16 %v532
        %v753 = vunpack.c.h.b16 %v532
        %v754 = vunpack.c.l.b16 %v533
        %v755 = vunpack.c.l.b16 %v534
        %v756 = vunpack.c.h.b16 %v534
        %v757 = vunpack.c.l.b16 %v535
        %v758 = vunpack.c.l.b16 %v536
        %v759 = vunpack.c.h.b16 %v536
        %v760 = vunpack.c.l.b16 %v537
        %v761 = vunpack.c.l.b16 %v538
        %v762 = vunpack.c.h.b16 %v538
        %v763 = vunpack.c.l.b16 %v539
        %v764 = vpack.c.b16 %v719, %v716
        %v765 = vpack.c.b16 %v720, %v717
        %v766 = vpack.c.b16 %v721, %v718
        %v767 = vpack.c.b16 %v725, %v722
        %v768 = vpack.c.b16 %v726, %v723
        %v769 = vpack.c.b16 %v727, %v724
        %v770 = vpack.c.b16 %v731, %v728
        %v771 = vpack.c.b16 %v732, %v729
        %v772 = vpack.c.b16 %v733, %v730
        %v773 = vpack.c.b16 %v737, %v734
        %v774 = vpack.c.b16 %v738, %v735
        %v775 = vpack.c.b16 %v739, %v736
        %v776 = vpack.c.b16 %v743, %v740
        %v777 = vpack.c.b16 %v744, %v741
        %v778 = vpack.c.b16 %v745, %v742
        %v779 = vpack.c.b16 %v749, %v746
        %v780 = vpack.c.b16 %v750, %v747
        %v781 = vpack.c.b16 %v751, %v748
        %v782 = vpack.c.b16 %v755, %v752
        %v783 = vpack.c.b16 %v756, %v753
        %v784 = vpack.c.b16 %v757, %v754
        %v785 = vpack.c.b16 %v761, %v758
        %v786 = vpack.c.b16 %v762, %v759
        %v787 = vpack.c.b16 %v763, %v760
        %v860 = vunpack.c.l.b16 %v540
        %v861 = vunpack.c.h.b16 %v540
        %v862 = vunpack.c.l.b16 %v541
        %v863 = vunpack.c.h.b16 %v541
        %v864 = vunpack.c.l.b16 %v542
        %v865 = vunpack.c.h.b16 %v542
        %v866 = vunpack.c.l.b16 %v543
        %v867 = vunpack.c.h.b16 %v543
        %v868 = vunpack.c.l.b16 %v544
        %v869 = vunpack.c.h.b16 %v544
        %v870 = vunpack.c.l.b16 %v545
        %v871 = vunpack.c.h.b16 %v545
        %v872 = vunpack.c.l.b16 %v546
        %v873 = vunpack.c.h.b16 %v546
        %v874 = vunpack.c.l.b16 %v547
        %v875 = vunpack.c.h.b16 %v547
        %v876 = vunpack.c.l.b16 %v548
        %v877 = vunpack.c.h.b16 %v548
        %v878 = vunpack.c.l.b16 %v549
        %v879 = vunpack.c.h.b16 %v549
        %v880 = vunpack.c.l.b16 %v550
        %v881 = vunpack.c.h.b16 %v550
        %v882 = vunpack.c.l.b16 %v551
        %v883 = vunpack.c.h.b16 %v551
        %v884 = vunpack.c.l.b16 %v552
        %v885 = vunpack.c.h.b16 %v552
        %v886 = vunpack.c.l.b16 %v553
        %v887 = vunpack.c.h.b16 %v553
        %v888 = vunpack.c.l.b16 %v554
        %v889 = vunpack.c.h.b16 %v554
        %v890 = vunpack.c.l.b16 %v555
        %v891 = vunpack.c.h.b16 %v555
        %v892 = vunpack.c.l.b16 %v556
        %v893 = vunpack.c.h.b16 %v556
        %v894 = vunpack.c.l.b16 %v557
        %v895 = vunpack.c.h.b16 %v557
        %v896 = vunpack.c.l.b16 %v558
        %v897 = vunpack.c.h.b16 %v558
        %v898 = vunpack.c.l.b16 %v559
        %v899 = vunpack.c.h.b16 %v559
        %v900 = vunpack.c.l.b16 %v560
        %v901 = vunpack.c.h.b16 %v560
        %v902 = vunpack.c.l.b16 %v561
        %v903 = vunpack.c.h.b16 %v561
        %v904 = vunpack.c.l.b16 %v562
        %v905 = vunpack.c.h.b16 %v562
        %v906 = vunpack.c.l.b16 %v563
        %v907 = vunpack.c.h.b16 %v563
        %v908 = vunpack.c.l.b16 %v564
        %v909 = vunpack.c.h.b16 %v564
        %v910 = vunpack.c.l.b16 %v565
        %v911 = vunpack.c.h.b16 %v565
        %v912 = vunpack.c.l.b16 %v566
        %v913 = vunpack.c.h.b16 %v566
        %v914 = vunpack.c.l.b16 %v567
        %v915 = vunpack.c.h.b16 %v567
        %v916 = vunpack.c.l.b16 %v568
        %v917 = vunpack.c.h.b16 %v568
        %v918 = vunpack.c.l.b16 %v569
        %v919 = vunpack.c.h.b16 %v569
        %v920 = vunpack.c.l.b16 %v570
        %v921 = vunpack.c.h.b16 %v570
        %v922 = vunpack.c.l.b16 %v571
        %v923 = vunpack.c.h.b16 %v571
        %v924 = vunpack.c.l.b16 %v572
        %v925 = vunpack.c.h.b16 %v572
        %v926 = vunpack.c.l.b16 %v573
        %v927 = vunpack.c.h.b16 %v573
        %v928 = vunpack.c.l.b16 %v574
        %v929 = vunpack.c.h.b16 %v574
        %v930 = vunpack.c.l.b16 %v575
        %v931 = vunpack.c.h.b16 %v575
        %v932 = vunpack.c.l.b16 %v576
        %v933 = vunpack.c.h.b16 %v576
        %v934 = vunpack.c.l.b16 %v577
        %v935 = vunpack.c.h.b16 %v577
        %v936 = vunpack.c.l.b16 %v578
        %v937 = vunpack.c.h.b16 %v578
        %v938 = vunpack.c.l.b16 %v579
        %v939 = vunpack.c.h.b16 %v579
        %v940 = vunpack.c.l.b16 %v580
        %v941 = vunpack.c.h.b16 %v580
        %v942 = vunpack.c.l.b16 %v581
        %v943 = vunpack.c.h.b16 %v581
        %v944 = vunpack.c.l.b16 %v582
        %v945 = vunpack.c.h.b16 %v582
        %v946 = vunpack.c.l.b16 %v583
        %v947 = vunpack.c.h.b16 %v583
        %v948 = vunpack.c.l.b16 %v584
        %v949 = vunpack.c.h.b16 %v584
        %v950 = vunpack.c.l.b16 %v585
        %v951 = vunpack.c.h.b16 %v585
        %v952 = vunpack.c.l.b16 %v586
        %v953 = vunpack.c.h.b16 %v586
        %v954 = vunpack.c.l.b16 %v587
        %v955 = vunpack.c.h.b16 %v587
        %v956 = vpack.c.b16 %v862, %v860
        %v957 = vpack.c.b16 %v863, %v861
        %v958 = vpack.c.b16 %v866, %v864
        %v959 = vpack.c.b16 %v867, %v865
        %v960 = vpack.c.b16 %v870, %v868
        %v961 = vpack.c.b16 %v871, %v869
        %v962 = vpack.c.b16 %v874, %v872
        %v963 = vpack.c.b16 %v875, %v873
        %v964 = vpack.c.b16 %v878, %v876
        %v965 = vpack.c.b16 %v879, %v877
        %v966 = vpack.c.b16 %v882, %v880
        %v967 = vpack.c.b16 %v883, %v881
        %v968 = vpack.c.b16 %v886, %v884
        %v969 = vpack.c.b16 %v887, %v885
        %v970 = vpack.c.b16 %v890, %v888
        %v971 = vpack.c.b16 %v891, %v889
        %v972 = vpack.c.b16 %v894, %v892
        %v973 = vpack.c.b16 %v895, %v893
        %v974 = vpack.c.b16 %v898, %v896
        %v975 = vpack.c.b16 %v899, %v897
        %v976 = vpack.c.b16 %v902, %v900
        %v977 = vpack.c.b16 %v903, %v901
        %v978 = vpack.c.b16 %v906, %v904
        %v979 = vpack.c.b16 %v907, %v905
        %v980 = vpack.c.b16 %v910, %v908
        %v981 = vpack.c.b16 %v911, %v909
        %v982 = vpack.c.b16 %v914, %v912
        %v983 = vpack.c.b16 %v915, %v913
        %v984 = vpack.c.b16 %v918, %v916
        %v985 = vpack.c.b16 %v919, %v917
        %v986 = vpack.c.b16 %v922, %v920
        %v987 = vpack.c.b16 %v923, %v921
        %v988 = vpack.c.b16 %v926, %v924
        %v989 = vpack.c.b16 %v927, %v925
        %v990 = vpack.c.b16 %v930, %v928
        %v991 = vpack.c.b16 %v931, %v929
        %v992 = vpack.c.b16 %v934, %v932
        %v993 = vpack.c.b16 %v935, %v933
        %v994 = vpack.c.b16 %v938, %v936
        %v995 = vpack.c.b16 %v939, %v937
        %v996 = vpack.c.b16 %v942, %v940
        %v997 = vpack.c.b16 %v943, %v941
        %v998 = vpack.c.b16 %v946, %v944
        %v999 = vpack.c.b16 %v947, %v945
        %v1000 = vpack.c.b16 %v950, %v948
        %v1001 = vpack.c.b16 %v951, %v949
        %v1002 = vpack.c.b16 %v954, %v952
        %v1003 = vpack.c.b16 %v955, %v953
        %1052 = vmatprep.subr.bf16.mxu0 %v957
        %1053 = vmatpush1.bf16.msra.mxu0 %v956
        %1054 = vmatprep.subr.bf16.mxu0 %v959
        %1055 = vmatpush1.bf16.msra.mxu0 %v958
        %1056 = vmatprep.subr.bf16.mxu0 %v961
        %1057 = vmatpush1.bf16.msra.mxu0 %v960
        %1058 = vmatprep.subr.bf16.mxu0 %v963
        %1059 = vmatpush1.bf16.msra.mxu0 %v962
        %1060 = vmatprep.subr.bf16.mxu0 %v965
        %1061 = vmatpush1.bf16.msra.mxu0 %v964
        %1062 = vmatprep.subr.bf16.mxu0 %v967
        %1063 = vmatpush1.bf16.msra.mxu0 %v966
        %1064 = vmatprep.subr.bf16.mxu0 %v969
        %1065 = vmatpush1.bf16.msra.mxu0 %v968
        %1066 = vmatprep.subr.bf16.mxu0 %v971
        %1067 = vmatpush1.bf16.msra.mxu0 %v970
        %1068 = vmatprep.subr.bf16.mxu0 %v973
        %1069 = vmatpush1.bf16.msra.mxu0 %v972
        %1070 = vmatprep.subr.bf16.mxu0 %v975
        %1071 = vmatpush1.bf16.msra.mxu0 %v974
        %1072 = vmatprep.subr.bf16.mxu0 %v977
        %1073 = vmatpush1.bf16.msra.mxu0 %v976
        %1074 = vmatprep.subr.bf16.mxu0 %v979
        %1075 = vmatpush1.bf16.msra.mxu0 %v978
        %1076 = vmatprep.subr.bf16.mxu0 %v981
        %1077 = vmatpush1.bf16.msra.mxu0 %v980
        %1078 = vmatprep.subr.bf16.mxu0 %v983
        %1079 = vmatpush1.bf16.msra.mxu0 %v982
        %1080 = vmatprep.subr.bf16.mxu0 %v985
        %1081 = vmatpush1.bf16.msra.mxu0 %v984
        %1082 = vmatprep.subr.bf16.mxu0 %v987
        %1083 = vmatpush1.bf16.msra.mxu0 %v986
        %1084 = vmatprep.mubr.bf16.mxu0 %v765
        %1085 = vmatmul.mubr.bf16.gmra.mrb[0].mxu0 %v764
        %v1086 = vpop.f32.mrb[0].mxu0
        %v1087 = vadd.f32 %v607, %v1086
        %v1088 = vpop.f32.mrb[0].mxu0
        %v1089 = vadd.f32 %v607, %v1088
        %v1090 = vpop.f32.mrb[0].mxu0
        %v1091 = vadd.f32 %v612, %v1090
        %v1092 = vpop.f32.mrb[0].mxu0
        %v1093 = vadd.f32 %v612, %v1092
        %1094 = vmatprep.mubr.bf16.mxu0 %v768
        %1095 = vmatmul.mubr.bf16.gmra.mrb[0].mxu0 %v767
        %v1096 = vpop.f32.mrb[0].mxu0
        %v1097 = vadd.f32 %v617, %v1096
        %v1098 = vpop.f32.mrb[0].mxu0
        %v1099 = vadd.f32 %v617, %v1098
        %v1100 = vpop.f32.mrb[0].mxu0
        %v1101 = vadd.f32 %v622, %v1100
        %v1102 = vpop.f32.mrb[0].mxu0
        %v1103 = vadd.f32 %v622, %v1102
        %1104 = vmatprep.mubr.bf16.mxu0 %v771
        %1105 = vmatmul.mubr.bf16.gmra.mrb[0].mxu0 %v770
        %v1106 = vpop.f32.mrb[0].mxu0
        %v1107 = vadd.f32 %v627, %v1106
        %v1108 = vpop.f32.mrb[0].mxu0
        %v1109 = vadd.f32 %v627, %v1108
        %v1110 = vpop.f32.mrb[0].mxu0
        %v1111 = vadd.f32 %v632, %v1110
        %v1112 = vpop.f32.mrb[0].mxu0
        %v1113 = vadd.f32 %v632, %v1112
        %1114 = vmatprep.mubr.bf16.mxu0 %v774
        %1115 = vmatmul.mubr.bf16.gmra.mrb[0].mxu0 %v773
        %v1116 = vpop.f32.mrb[0].mxu0
        %v1117 = vadd.f32 %v637, %v1116
        %v1118 = vpop.f32.mrb[0].mxu0
        %v1119 = vadd.f32 %v637, %v1118
        %v1120 = vpop.f32.mrb[0].mxu0
        %v1121 = vadd.f32 %v642, %v1120
        %v1122 = vpop.f32.mrb[0].mxu0
        %v1123 = vadd.f32 %v642, %v1122
        %1124 = vmatprep.mubr.bf16.mxu0 %v777
        %1125 = vmatmul.mubr.bf16.gmra.mrb[0].mxu0 %v776
        %v1126 = vpop.f32.mrb[0].mxu0
        %v1127 = vadd.f32 %v647, %v1126
        %v1128 = vpop.f32.mrb[0].mxu0
        %v1129 = vadd.f32 %v647, %v1128
        %v1130 = vpop.f32.mrb[0].mxu0
        %v1131 = vadd.f32 %v652, %v1130
        %v1132 = vpop.f32.mrb[0].mxu0
        %v1133 = vadd.f32 %v652, %v1132
        %1134 = vmatprep.mubr.bf16.mxu0 %v780
        %1135 = vmatmul.mubr.bf16.gmra.mrb[0].mxu0 %v779
        %v1136 = vpop.f32.mrb[0].mxu0
        %v1137 = vadd.f32 %v657, %v1136
        %v1138 = vpop.f32.mrb[0].mxu0
        %v1139 = vadd.f32 %v657, %v1138
        %v1140 = vpop.f32.mrb[0].mxu0
        %v1141 = vadd.f32 %v662, %v1140
        %v1142 = vpop.f32.mrb[0].mxu0
        %v1143 = vadd.f32 %v662, %v1142
        %1144 = vmatprep.mubr.bf16.mxu0 %v783
        %1145 = vmatmul.mubr.bf16.gmra.mrb[0].mxu0 %v782
        %v1146 = vpop.f32.mrb[0].mxu0
        %v1147 = vadd.f32 %v667, %v1146
        %v1148 = vpop.f32.mrb[0].mxu0
        %v1149 = vadd.f32 %v667, %v1148
        %v1150 = vpop.f32.mrb[0].mxu0
        %v1151 = vadd.f32 %v672, %v1150
        %v1152 = vpop.f32.mrb[0].mxu0
        %v1153 = vadd.f32 %v672, %v1152
        %1154 = vmatprep.mubr.bf16.mxu0 %v786
        %1155 = vmatmul.mubr.bf16.gmra.mrb[0].mxu0 %v785
        %v1156 = vpop.f32.mrb[0].mxu0
        %v1157 = vadd.f32 %v677, %v1156
        %v1158 = vpop.f32.mrb[0].mxu0
        %v1159 = vadd.f32 %v677, %v1158
        %v1160 = vpop.f32.mrb[0].mxu0
        %v1161 = vadd.f32 %v682, %v1160
        %v1162 = vpop.f32.mrb[0].mxu0
        %v1163 = vadd.f32 %v682, %v1162
        %1164 = vdwg.mxu0
        %1165 = vmatprep.subr.bf16.mxu0 %v989
        %1166 = vmatpush1.bf16.msra.mxu0 %v988
        %1167 = vmatprep.subr.bf16.mxu0 %v991
        %1168 = vmatpush1.bf16.msra.mxu0 %v990
        %1169 = vmatprep.subr.bf16.mxu0 %v993
        %1170 = vmatpush1.bf16.msra.mxu0 %v992
        %1171 = vmatprep.subr.bf16.mxu0 %v995
        %1172 = vmatpush1.bf16.msra.mxu0 %v994
        %1173 = vmatprep.subr.bf16.mxu0 %v997
        %1174 = vmatpush1.bf16.msra.mxu0 %v996
        %1175 = vmatprep.subr.bf16.mxu0 %v999
        %1176 = vmatpush1.bf16.msra.mxu0 %v998
        %1177 = vmatprep.subr.bf16.mxu0 %v1001
        %1178 = vmatpush1.bf16.msra.mxu0 %v1000
        %1179 = vmatprep.subr.bf16.mxu0 %v1003
        %1180 = vmatpush1.bf16.msra.mxu0 %v1002
        %1181 = vmatprep.subr.bf16.mxu0 0
        %1182 = vmatpush1.bf16.msra.mxu0 0
        %1183 = vmatprep.subr.bf16.mxu0 0
        %1184 = vmatpush1.bf16.msra.mxu0 0
        %1185 = vmatprep.subr.bf16.mxu0 0
        %1186 = vmatpush1.bf16.msra.mxu0 0
        %1187 = vmatprep.subr.bf16.mxu0 0
        %1188 = vmatpush1.bf16.msra.mxu0 0
        %1189 = vmatprep.subr.bf16.mxu0 0
        %1190 = vmatpush1.bf16.msra.mxu0 0
        %1191 = vmatprep.subr.bf16.mxu0 0
        %1192 = vmatpush1.bf16.msra.mxu0 0
        %1193 = vmatprep.subr.bf16.mxu0 0
        %1194 = vmatpush1.bf16.msra.mxu0 0
        %1195 = vmatprep.subr.bf16.mxu0 0
        %1196 = vmatpush1.bf16.msra.mxu0 0
        %1197 = vmatprep.mubr.bf16.mxu0 0
        %1198 = vmatmul.mubr.bf16.gmra.mrb[0].mxu0 %v766
        %v1199 = vpop.f32.mrb[0].mxu0
        %v1200 = vadd.f32 %v1087, %v1199
        %v1201 = vpop.f32.mrb[0].mxu0
        %v1202 = vadd.f32 %v1089, %v1201
        %v1203 = vpop.f32.mrb[0].mxu0
        %v1204 = vadd.f32 %v1091, %v1203
        %v1205 = vpop.f32.mrb[0].mxu0
        %v1206 = vadd.f32 %v1093, %v1205
        %1207 = vmatprep.mubr.bf16.mxu0 0
        %1208 = vmatmul.mubr.bf16.gmra.mrb[0].mxu0 %v769
        %v1209 = vpop.f32.mrb[0].mxu0
        %v1210 = vadd.f32 %v1097, %v1209
        %v1211 = vpop.f32.mrb[0].mxu0
        %v1212 = vadd.f32 %v1099, %v1211
        %v1213 = vpop.f32.mrb[0].mxu0
        %v1214 = vadd.f32 %v1101, %v1213
        %v1215 = vpop.f32.mrb[0].mxu0
        %v1216 = vadd.f32 %v1103, %v1215
        %1217 = vmatprep.mubr.bf16.mxu0 0
        %1218 = vmatmul.mubr.bf16.gmra.mrb[0].mxu0 %v772
        %v1219 = vpop.f32.mrb[0].mxu0
        %v1220 = vadd.f32 %v1107, %v1219
        %v1221 = vpop.f32.mrb[0].mxu0
        %v1222 = vadd.f32 %v1109, %v1221
        %v1223 = vpop.f32.mrb[0].mxu0
        %v1224 = vadd.f32 %v1111, %v1223
        %v1225 = vpop.f32.mrb[0].mxu0
        %v1226 = vadd.f32 %v1113, %v1225
        %1227 = vmatprep.mubr.bf16.mxu0 0
        %1228 = vmatmul.mubr.bf16.gmra.mrb[0].mxu0 %v775
        %v1229 = vpop.f32.mrb[0].mxu0
        %v1230 = vadd.f32 %v1117, %v1229
        %v1231 = vpop.f32.mrb[0].mxu0
        %v1232 = vadd.f32 %v1119, %v1231
        %v1233 = vpop.f32.mrb[0].mxu0
        %v1234 = vadd.f32 %v1121, %v1233
        %v1235 = vpop.f32.mrb[0].mxu0
        %v1236 = vadd.f32 %v1123, %v1235
        %1237 = vmatprep.mubr.bf16.mxu0 0
        %1238 = vmatmul.mubr.bf16.gmra.mrb[0].mxu0 %v778
        %v1239 = vpop.f32.mrb[0].mxu0
        %v1240 = vadd.f32 %v1127, %v1239
        %v1241 = vpop.f32.mrb[0].mxu0
        %v1242 = vadd.f32 %v1129, %v1241
        %v1243 = vpop.f32.mrb[0].mxu0
        %v1244 = vadd.f32 %v1131, %v1243
        %v1245 = vpop.f32.mrb[0].mxu0
        %v1246 = vadd.f32 %v1133, %v1245
        %1247 = vmatprep.mubr.bf16.mxu0 0
        %1248 = vmatmul.mubr.bf16.gmra.mrb[0].mxu0 %v781
        %v1249 = vpop.f32.mrb[0].mxu0
        %v1250 = vadd.f32 %v1137, %v1249
        %v1251 = vpop.f32.mrb[0].mxu0
        %v1252 = vadd.f32 %v1139, %v1251
        %v1253 = vpop.f32.mrb[0].mxu0
        %v1254 = vadd.f32 %v1141, %v1253
        %v1255 = vpop.f32.mrb[0].mxu0
        %v1256 = vadd.f32 %v1143, %v1255
        %1257 = vmatprep.mubr.bf16.mxu0 0
        %1258 = vmatmul.mubr.bf16.gmra.mrb[0].mxu0 %v784
        %v1259 = vpop.f32.mrb[0].mxu0
        %v1260 = vadd.f32 %v1147, %v1259
        %v1261 = vpop.f32.mrb[0].mxu0
        %v1262 = vadd.f32 %v1149, %v1261
        %v1263 = vpop.f32.mrb[0].mxu0
        %v1264 = vadd.f32 %v1151, %v1263
        %v1265 = vpop.f32.mrb[0].mxu0
        %v1266 = vadd.f32 %v1153, %v1265
        %1267 = vmatprep.mubr.bf16.mxu0 0
        %1268 = vmatmul.mubr.bf16.gmra.mrb[0].mxu0 %v787
        %v1269 = vpop.f32.mrb[0].mxu0
        %v1270 = vadd.f32 %v1157, %v1269
        %v1271 = vpop.f32.mrb[0].mxu0
        %v1272 = vadd.f32 %v1159, %v1271
        %v1273 = vpop.f32.mrb[0].mxu0
        %v1274 = vadd.f32 %v1161, %v1273
        %v1275 = vpop.f32.mrb[0].mxu0
        %v1276 = vadd.f32 %v1163, %v1275
        %1277 = vdwg.mxu0
        %v1278 = vld [vmem:[%s471] sm:$0xff]
        %v1279 = vld [vmem:[%s471 + $0x8] sm:$0xff]
        %v1280 = vld [vmem:[%s471 + $0x10] sm:$0xff]
        %v1281 = vld [vmem:[%s471 + $0x18] sm:$0xff]
        %v1282 = vld [vmem:[%s471 + $0x20] sm:$0xff]
        %v1283 = vld [vmem:[%s471 + $0x28] sm:$0xff]
        %v1284 = vld [vmem:[%s471 + $0x30] sm:$0xff]
        %v1285 = vld [vmem:[%s471 + $0x38] sm:$0xff]
        %v1286 = vxor.u32 %v1240, 2147483648
        %v1287 = vxor.u32 %v1242, 2147483648
        %v1288 = vxor.u32 %v1244, 2147483648
        %v1289 = vxor.u32 %v1246, 2147483648
        %v1290 = vxor.u32 %v1250, 2147483648
        %v1291 = vxor.u32 %v1252, 2147483648
        %v1292 = vxor.u32 %v1254, 2147483648
        %v1293 = vxor.u32 %v1256, 2147483648
        %v1294 = vmul.f32 %v1286, 1.442695
        %v1295 = vpow.pop %v1294
        %v1296 = vmul.f32 %v1287, 1.442695
        %v1297 = vpow.pop %v1296
        %v1298 = vmul.f32 %v1288, 1.442695
        %v1299 = vpow.pop %v1298
        %v1300 = vmul.f32 %v1289, 1.442695
        %v1301 = vpow.pop %v1300
        %v1302 = vmul.f32 %v1290, 1.442695
        %v1303 = vpow.pop %v1302
        %v1304 = vmul.f32 %v1291, 1.442695
        %v1305 = vpow.pop %v1304
        %v1306 = vmul.f32 %v1292, 1.442695
        %v1307 = vpow.pop %v1306
        %v1308 = vmul.f32 %v1293, 1.442695
        %v1309 = vpow.pop %v1308
        %v1310 = vadd.f32 %v1295, 1.0
        %v1311 = vadd.f32 %v1297, 1.0
        %v1312 = vadd.f32 %v1299, 1.0
        %v1313 = vadd.f32 %v1301, 1.0
        %v1314 = vadd.f32 %v1303, 1.0
        %v1315 = vadd.f32 %v1305, 1.0
        %v1316 = vadd.f32 %v1307, 1.0
        %v1317 = vadd.f32 %v1309, 1.0
        %v1318 = vrcp.pop %v1310
        %v1319 = vmul.f32 1.0, %v1318
        %v1320 = vrcp.pop %v1311
        %v1321 = vmul.f32 1.0, %v1320
        %v1322 = vrcp.pop %v1312
        %v1323 = vmul.f32 1.0, %v1322
        %v1324 = vrcp.pop %v1313
        %v1325 = vmul.f32 1.0, %v1324
        %v1326 = vrcp.pop %v1314
        %v1327 = vmul.f32 1.0, %v1326
        %v1328 = vrcp.pop %v1315
        %v1329 = vmul.f32 1.0, %v1328
        %v1330 = vrcp.pop %v1316
        %v1331 = vmul.f32 1.0, %v1330
        %v1332 = vrcp.pop %v1317
        %v1333 = vmul.f32 1.0, %v1332
        %v1334 = vmul.f32 %v1319, %v1278
        %v1335 = vmul.f32 %v1321, %v1279
        %v1336 = vmul.f32 %v1323, %v1280
        %v1337 = vmul.f32 %v1325, %v1281
        %v1338 = vmul.f32 %v1327, %v1282
        %v1339 = vmul.f32 %v1329, %v1283
        %v1340 = vmul.f32 %v1331, %v1284
        %v1341 = vmul.f32 %v1333, %v1285
        %v1342 = vxor.u32 %v1220, 2147483648
        %v1343 = vxor.u32 %v1222, 2147483648
        %v1344 = vxor.u32 %v1224, 2147483648
        %v1345 = vxor.u32 %v1226, 2147483648
        %v1346 = vxor.u32 %v1230, 2147483648
        %v1347 = vxor.u32 %v1232, 2147483648
        %v1348 = vxor.u32 %v1234, 2147483648
        %v1349 = vxor.u32 %v1236, 2147483648
        %v1350 = vmul.f32 %v1342, 1.442695
        %v1351 = vpow.pop %v1350
        %v1352 = vmul.f32 %v1343, 1.442695
        %v1353 = vpow.pop %v1352
        %v1354 = vmul.f32 %v1344, 1.442695
        %v1355 = vpow.pop %v1354
        %v1356 = vmul.f32 %v1345, 1.442695
        %v1357 = vpow.pop %v1356
        %v1358 = vmul.f32 %v1346, 1.442695
        %v1359 = vpow.pop %v1358
        %v1360 = vmul.f32 %v1347, 1.442695
        %v1361 = vpow.pop %v1360
        %v1362 = vmul.f32 %v1348, 1.442695
        %v1363 = vpow.pop %v1362
        %v1364 = vmul.f32 %v1349, 1.442695
        %v1365 = vpow.pop %v1364
        %v1366 = vadd.f32 %v1351, 1.0
        %v1367 = vadd.f32 %v1353, 1.0
        %v1368 = vadd.f32 %v1355, 1.0
        %v1369 = vadd.f32 %v1357, 1.0
        %v1370 = vadd.f32 %v1359, 1.0
        %v1371 = vadd.f32 %v1361, 1.0
        %v1372 = vadd.f32 %v1363, 1.0
        %v1373 = vadd.f32 %v1365, 1.0
        %v1374 = vrcp.pop %v1366
        %v1375 = vmul.f32 1.0, %v1374
        %v1376 = vrcp.pop %v1367
        %v1377 = vmul.f32 1.0, %v1376
        %v1378 = vrcp.pop %v1368
        %v1379 = vmul.f32 1.0, %v1378
        %v1380 = vrcp.pop %v1369
        %v1381 = vmul.f32 1.0, %v1380
        %v1382 = vrcp.pop %v1370
        %v1383 = vmul.f32 1.0, %v1382
        %v1384 = vrcp.pop %v1371
        %v1385 = vmul.f32 1.0, %v1384
        %v1386 = vrcp.pop %v1372
        %v1387 = vmul.f32 1.0, %v1386
        %v1388 = vrcp.pop %v1373
        %v1389 = vmul.f32 1.0, %v1388
        %v1390 = vtanh.pop %v1200
        %v1391 = vtanh.pop %v1202
        %v1392 = vtanh.pop %v1204
        %v1393 = vtanh.pop %v1206
        %v1394 = vtanh.pop %v1210
        %v1395 = vtanh.pop %v1212
        %v1396 = vtanh.pop %v1214
        %v1397 = vtanh.pop %v1216
        %v1398 = vmul.f32 %v1375, %v1390
        %v1399 = vmul.f32 %v1377, %v1391
        %v1400 = vmul.f32 %v1379, %v1392
        %v1401 = vmul.f32 %v1381, %v1393
        %v1402 = vmul.f32 %v1383, %v1394
        %v1403 = vmul.f32 %v1385, %v1395
        %v1404 = vmul.f32 %v1387, %v1396
        %v1405 = vmul.f32 %v1389, %v1397
        %v1406 = vadd.f32 %v1334, %v1398
        %v1407 = vadd.f32 %v1335, %v1399
        %v1408 = vadd.f32 %v1336, %v1400
        %v1409 = vadd.f32 %v1337, %v1401
        %v1410 = vadd.f32 %v1338, %v1402
        %v1411 = vadd.f32 %v1339, %v1403
        %v1412 = vadd.f32 %v1340, %v1404
        %v1413 = vadd.f32 %v1341, %v1405
        %v1414 = vxor.u32 %v1260, 2147483648
        %v1415 = vxor.u32 %v1262, 2147483648
        %v1416 = vxor.u32 %v1264, 2147483648
        %v1417 = vxor.u32 %v1266, 2147483648
        %v1418 = vxor.u32 %v1270, 2147483648
        %v1419 = vxor.u32 %v1272, 2147483648
        %v1420 = vxor.u32 %v1274, 2147483648
        %v1421 = vxor.u32 %v1276, 2147483648
        %v1422 = vmul.f32 %v1414, 1.442695
        %v1423 = vpow.pop %v1422
        %v1424 = vmul.f32 %v1415, 1.442695
        %v1425 = vpow.pop %v1424
        %v1426 = vmul.f32 %v1416, 1.442695
        %v1427 = vpow.pop %v1426
        %v1428 = vmul.f32 %v1417, 1.442695
        %v1429 = vpow.pop %v1428
        %v1430 = vmul.f32 %v1418, 1.442695
        %v1431 = vpow.pop %v1430
        %v1432 = vmul.f32 %v1419, 1.442695
        %v1433 = vpow.pop %v1432
        %v1434 = vmul.f32 %v1420, 1.442695
        %v1435 = vpow.pop %v1434
        %v1436 = vmul.f32 %v1421, 1.442695
        %v1437 = vpow.pop %v1436
        %v1438 = vadd.f32 %v1423, 1.0
        %v1439 = vadd.f32 %v1425, 1.0
        %v1440 = vadd.f32 %v1427, 1.0
        %v1441 = vadd.f32 %v1429, 1.0
        %v1442 = vadd.f32 %v1431, 1.0
        %v1443 = vadd.f32 %v1433, 1.0
        %v1444 = vadd.f32 %v1435, 1.0
        %v1445 = vadd.f32 %v1437, 1.0
        %v1446 = vrcp.pop %v1438
        %v1447 = vmul.f32 1.0, %v1446
        %v1448 = vrcp.pop %v1439
        %v1449 = vmul.f32 1.0, %v1448
        %v1450 = vrcp.pop %v1440
        %v1451 = vmul.f32 1.0, %v1450
        %v1452 = vrcp.pop %v1441
        %v1453 = vmul.f32 1.0, %v1452
        %v1454 = vrcp.pop %v1442
        %v1455 = vmul.f32 1.0, %v1454
        %v1456 = vrcp.pop %v1443
        %v1457 = vmul.f32 1.0, %v1456
        %v1458 = vrcp.pop %v1444
        %v1459 = vmul.f32 1.0, %v1458
        %v1460 = vrcp.pop %v1445
        %v1461 = vmul.f32 1.0, %v1460
        %v1462 = vtanh.pop %v1406
        %v1463 = vtanh.pop %v1407
        %v1464 = vtanh.pop %v1408
        %v1465 = vtanh.pop %v1409
        %v1466 = vtanh.pop %v1410
        %v1467 = vtanh.pop %v1411
        %v1468 = vtanh.pop %v1412
        %v1469 = vtanh.pop %v1413
        %v1470 = vmul.f32 %v1447, %v1462
        %v1471 = vmul.f32 %v1449, %v1463
        %v1472 = vmul.f32 %v1451, %v1464
        %v1473 = vmul.f32 %v1453, %v1465
        %v1474 = vmul.f32 %v1455, %v1466
        %v1475 = vmul.f32 %v1457, %v1467
        %v1476 = vmul.f32 %v1459, %v1468
        %v1477 = vmul.f32 %v1461, %v1469
        %1478 = vst [vmem:[%s496] sm:$0xff] %v1470
        %1479 = vst [vmem:[%s496 + $0x8] sm:$0xff] %v1471
        %1480 = vst [vmem:[%s496 + $0x10] sm:$0xff] %v1472
        %1481 = vst [vmem:[%s496 + $0x18] sm:$0xff] %v1473
        %1482 = vst [vmem:[%s496 + $0x20] sm:$0xff] %v1474
        %1483 = vst [vmem:[%s496 + $0x28] sm:$0xff] %v1475
        %1484 = vst [vmem:[%s496 + $0x30] sm:$0xff] %v1476
        %1485 = vst [vmem:[%s496 + $0x38] sm:$0xff] %v1477
        %1486 = vst [vmem:[%s502] sm:$0xff] %v1406
        %1487 = vst [vmem:[%s502 + $0x8] sm:$0xff] %v1407
        %1488 = vst [vmem:[%s502 + $0x10] sm:$0xff] %v1408
        %1489 = vst [vmem:[%s502 + $0x18] sm:$0xff] %v1409
        %1490 = vst [vmem:[%s502 + $0x20] sm:$0xff] %v1410
        %1491 = vst [vmem:[%s502 + $0x28] sm:$0xff] %v1411
        %1492 = vst [vmem:[%s502 + $0x30] sm:$0xff] %v1412
        %1493 = vst [vmem:[%s502 + $0x38] sm:$0xff] %v1413
        %s1494 = sand.u32 %s119, 1
        %s1495 = sand.u32 %s119, 1
        %s1496 = smul.addr %s1495, 64
        %s1497 = scalar_lea.vmem [#allocation4], %s1496
        %s1498 = sand.u32 %s145, 1
        %s1499 = sand.u32 %s145, 1
        %s1500 = smul.addr %s1499, 64
        %s1501 = scalar_lea.vmem [#allocation5], %s1500
        // Predicated region
        $region98: #{convlstm_cell_forward.1} parent=88 // pred_check
          %p1502 = pneg %p129
        $region99: #{convlstm_cell_forward.1} parent=88 // pred_check_branch
          %1504 = sbr.rel (%p1502) target = $region101
        $region100: #{convlstm_cell_forward.1} parent=88 // pred_region
          %s1505 = smul.u32 2, %s17
          %s1506 = smul.addr %s1505, 8
          %s1507 = scalar_lea.vmem %s4, %s1506
          // Predicated region
          $region102: #{convlstm_cell_forward.1} parent=100 // pred_check
            _
          $region103: #{convlstm_cell_forward.1} parent=100 // pred_check_branch
            %1509 = sbr.rel (0) target = $region105
          $region104: #{convlstm_cell_forward.1} parent=100 // pred_region
            // Predicated region
            $region106: #{convlstm_cell_forward.1} parent=104 // pred_check
              _
            $region107: #{convlstm_cell_forward.1} parent=104 // pred_check_branch
              %1511 = sbr.rel (0) target = $region109
            $region108: #{convlstm_cell_forward.1} parent=104 // pred_region
              loop: start=0, step=1, limit=1
              $region110: #{convlstm_cell_forward.1} parent=108 // loop_pre_header
                _
              $region111: #{convlstm_cell_forward.1} parent=108 // loop_header
                %s1513 = sphi 0, %s1517
                %p1514 = scmp.ge.s32.totalorder %s1513, 1
                %s1518 = sphi %s1497, %s1497
                %s1519 = sphi %s1507, %s1507
              $region112: #{convlstm_cell_forward.1} parent=108 // loop_header_branch
                %1516 = sbr.rel (%p1514) target = $region116
              $region113: #{convlstm_cell_forward.1} parent=108 // loop_body
                %v1520 = vld [vmem:[%s1518] sm:$0xff]
                %1521 = vst [vmem:[%s1519] sm:$0xff] %v1520
                %v1522 = vld [vmem:[%s1518 + $0x8] sm:$0xff]
                %1523 = vst [vmem:[%s1519 + $0x8] sm:$0xff] %v1522
                %v1524 = vld [vmem:[%s1518 + $0x10] sm:$0xff]
                %1525 = vst [vmem:[%s1519 + $0x20] sm:$0xff] %v1524
                %v1526 = vld [vmem:[%s1518 + $0x18] sm:$0xff]
                %1527 = vst [vmem:[%s1519 + $0x28] sm:$0xff] %v1526
                %v1528 = vld [vmem:[%s1518 + $0x20] sm:$0xff]
                %1529 = vst [vmem:[%s1519 + $0x40] sm:$0xff] %v1528
                %v1530 = vld [vmem:[%s1518 + $0x28] sm:$0xff]
                %1531 = vst [vmem:[%s1519 + $0x48] sm:$0xff] %v1530
                %v1532 = vld [vmem:[%s1518 + $0x30] sm:$0xff]
                %1533 = vst [vmem:[%s1519 + $0x60] sm:$0xff] %v1532
                %v1534 = vld [vmem:[%s1518 + $0x38] sm:$0xff]
                %1535 = vst [vmem:[%s1519 + $0x68] sm:$0xff] %v1534
              $region114: #{convlstm_cell_forward.1} parent=108 // loop_footer
                %s1517 = sadd.s32 1, %s1513
              $region115: #{convlstm_cell_forward.1} parent=108 // loop_footer_branch
                %1512 = sbr.rel target = $region111
              $region116: #{convlstm_cell_forward.1} parent=108 // loop_exit
                _
            $region109: #{convlstm_cell_forward.1} parent=104 // pred_fallthru
              _
            // Predicated region
            $region117: #{convlstm_cell_forward.1} parent=104 // pred_check
              _
            $region118: #{convlstm_cell_forward.1} parent=104 // pred_check_branch
              %1537 = sbr.rel target = $region120
            $region119: #{convlstm_cell_forward.1} parent=104 // pred_region
              _
            $region120: #{convlstm_cell_forward.1} parent=104 // pred_fallthru
              _
          $region105: #{convlstm_cell_forward.1} parent=100 // pred_fallthru
            _
          %1538 = vnop
        $region101: #{convlstm_cell_forward.1} parent=88 // pred_fallthru
          _
        // Predicated region
        $region121: #{convlstm_cell_forward.1} parent=88 // pred_check
          %p1539 = pneg %p155
        $region122: #{convlstm_cell_forward.1} parent=88 // pred_check_branch
          %1541 = sbr.rel (%p1539) target = $region124
        $region123: #{convlstm_cell_forward.1} parent=88 // pred_region
          %s1542 = smul.u32 2, %s17
          %s1543 = smul.addr %s1542, 8
          %s1544 = scalar_lea.vmem %s5, %s1543
          // Predicated region
          $region125: #{convlstm_cell_forward.1} parent=123 // pred_check
            _
          $region126: #{convlstm_cell_forward.1} parent=123 // pred_check_branch
            %1546 = sbr.rel (0) target = $region128
          $region127: #{convlstm_cell_forward.1} parent=123 // pred_region
            // Predicated region
            $region129: #{convlstm_cell_forward.1} parent=127 // pred_check
              _
            $region130: #{convlstm_cell_forward.1} parent=127 // pred_check_branch
              %1548 = sbr.rel (0) target = $region132
            $region131: #{convlstm_cell_forward.1} parent=127 // pred_region
              loop: start=0, step=1, limit=1
              $region133: #{convlstm_cell_forward.1} parent=131 // loop_pre_header
                _
              $region134: #{convlstm_cell_forward.1} parent=131 // loop_header
                %s1550 = sphi 0, %s1554
                %p1551 = scmp.ge.s32.totalorder %s1550, 1
                %s1555 = sphi %s1501, %s1501
                %s1556 = sphi %s1544, %s1544
              $region135: #{convlstm_cell_forward.1} parent=131 // loop_header_branch
                %1553 = sbr.rel (%p1551) target = $region139
              $region136: #{convlstm_cell_forward.1} parent=131 // loop_body
                %v1557 = vld [vmem:[%s1555] sm:$0xff]
                %1558 = vst [vmem:[%s1556] sm:$0xff] %v1557
                %v1559 = vld [vmem:[%s1555 + $0x8] sm:$0xff]
                %1560 = vst [vmem:[%s1556 + $0x8] sm:$0xff] %v1559
                %v1561 = vld [vmem:[%s1555 + $0x10] sm:$0xff]
                %1562 = vst [vmem:[%s1556 + $0x20] sm:$0xff] %v1561
                %v1563 = vld [vmem:[%s1555 + $0x18] sm:$0xff]
                %1564 = vst [vmem:[%s1556 + $0x28] sm:$0xff] %v1563
                %v1565 = vld [vmem:[%s1555 + $0x20] sm:$0xff]
                %1566 = vst [vmem:[%s1556 + $0x40] sm:$0xff] %v1565
                %v1567 = vld [vmem:[%s1555 + $0x28] sm:$0xff]
                %1568 = vst [vmem:[%s1556 + $0x48] sm:$0xff] %v1567
                %v1569 = vld [vmem:[%s1555 + $0x30] sm:$0xff]
                %1570 = vst [vmem:[%s1556 + $0x60] sm:$0xff] %v1569
                %v1571 = vld [vmem:[%s1555 + $0x38] sm:$0xff]
                %1572 = vst [vmem:[%s1556 + $0x68] sm:$0xff] %v1571
              $region137: #{convlstm_cell_forward.1} parent=131 // loop_footer
                %s1554 = sadd.s32 1, %s1550
              $region138: #{convlstm_cell_forward.1} parent=131 // loop_footer_branch
                %1549 = sbr.rel target = $region134
              $region139: #{convlstm_cell_forward.1} parent=131 // loop_exit
                _
            $region132: #{convlstm_cell_forward.1} parent=127 // pred_fallthru
              _
            // Predicated region
            $region140: #{convlstm_cell_forward.1} parent=127 // pred_check
              _
            $region141: #{convlstm_cell_forward.1} parent=127 // pred_check_branch
              %1574 = sbr.rel target = $region143
            $region142: #{convlstm_cell_forward.1} parent=127 // pred_region
              _
            $region143: #{convlstm_cell_forward.1} parent=127 // pred_fallthru
              _
          $region128: #{convlstm_cell_forward.1} parent=123 // pred_fallthru
            _
          %1575 = vnop
        $region124: #{convlstm_cell_forward.1} parent=88 // pred_fallthru
          _
      $region89: #{convlstm_cell_forward.1} parent=5 // pred_fallthru
        _
      %p1576 = scmp.le.s32.totalorder 2, %s12
      // Predicated region
      $region144: #{convlstm_cell_forward.1} parent=5 // pred_check
        %p1577 = pneg %p1576
      $region145: #{convlstm_cell_forward.1} parent=5 // pred_check_branch
        %1579 = sbr.rel (%p1577) target = $region147
      $region146: #{convlstm_cell_forward.1} parent=5 // pred_region
        %s1580 = ssub.s32 %s12, 2
        // Predicated region
        $region148: #{convlstm_cell_forward.1} parent=146 // pred_check
          %p1581 = pneg %p135
        $region149: #{convlstm_cell_forward.1} parent=146 // pred_check_branch
          %1583 = sbr.rel (%p1581) target = $region151
        $region150: #{convlstm_cell_forward.1} parent=146 // pred_region
          %s1584 = sand.u32 %s120, 1
          %s1585 = sand.u32 %s120, 1
          %s1586 = smul.addr %s1585, 64
          %s1587 = scalar_lea.vmem [#allocation4], %s1586
        $region151: #{convlstm_cell_forward.1} parent=146 // pred_fallthru
          _
        // Predicated region
        $region152: #{convlstm_cell_forward.1} parent=146 // pred_check
          %p1588 = pneg %p161
        $region153: #{convlstm_cell_forward.1} parent=146 // pred_check_branch
          %1590 = sbr.rel (%p1588) target = $region155
        $region154: #{convlstm_cell_forward.1} parent=146 // pred_region
          %s1591 = sand.u32 %s146, 1
          %s1592 = sand.u32 %s146, 1
          %s1593 = smul.addr %s1592, 64
          %s1594 = scalar_lea.vmem [#allocation5], %s1593
        $region155: #{convlstm_cell_forward.1} parent=146 // pred_fallthru
          _
      $region147: #{convlstm_cell_forward.1} parent=5 // pred_fallthru
        _
    $region6: #{convlstm_cell_forward.1} parent=1 // loop_footer
      %s16 = sadd.s32 1, %s12
    $region7: #{convlstm_cell_forward.1} parent=1 // loop_footer_branch
      %11 = sbr.rel target = $region3
    $region8: #{convlstm_cell_forward.1} parent=1 // loop_exit
      _

</llo_original>
